<compile_context>
chip_gen: v7x
topology: tpu7x:2x2x1
jax: 0.10.0
libtpu: 0.0.40
codegen_flags: <defaults>
</compile_context>

<pallas_src>
import functools

import jax
import jax.numpy as jnp
from jax import lax
from jax.experimental import pallas as pl
from jax.experimental.pallas import tpu as pltpu


def _mha_kernel(x_ref, wqkv_ref, wp_ref, bp_ref, o_ref, pv_ref, *,
                num_heads, head_size, seq_len, batch_block, compute_dtype):
    # x_ref block: (bb*T, C).  wqkv_ref: (C, 3*H*hs), Q columns pre-scaled by C**-0.5.
    # wp_ref: (H*hs, C).  bp_ref: (1, C).  pv_ref: VMEM scratch (bb*T, H*hs).
    H, hs = num_heads, head_size
    T, bb = seq_len, batch_block

    x = x_ref[...].astype(compute_dtype)                       # (bb*T, C)

    # Single fused, lane-dense QKV projection for the whole batch block
    # (M = bb*T rows on the MXU), f32 accumulation.
    qkv = jnp.dot(x, wqkv_ref[...],
                  preferred_element_type=jnp.float32)          # (bb*T, 3*H*hs)
    # One cast outside the head loop so the score and p@v matmuls get
    # compute_dtype (bf16) operands instead of f32-emulated MXU passes.
    qkv = qkv.astype(compute_dtype)

    # Causal (lower-triangular) mask for one (T, T) score tile.
    row = lax.broadcasted_iota(jnp.int32, (T, T), 0)
    col = lax.broadcasted_iota(jnp.int32, (T, T), 1)
    causal = col <= row

    exact = compute_dtype == jnp.float32

    # TODO(synk): at T = 8 the per-head softmax runs at ~6% lane utilization; packing
    # heads along lanes (T, H*T) would cut the VPU/EUP op count ~H x.  Left per-head
    # here for clarity at toy shapes; fold into the flash-tiled rewrite.
    for b in range(bb):                                        # static unroll
        r0 = b * T
        for h in range(H):                                     # static unroll over heads
            q = qkv[r0:r0 + T, h * hs:(h + 1) * hs]            # (T, hs), scale pre-folded
            k = qkv[r0:r0 + T, (H + h) * hs:(H + h + 1) * hs]  # (T, hs)
            v = qkv[r0:r0 + T, (2 * H + h) * hs:(2 * H + h + 1) * hs]

            # q @ k^T by contracting the last dims: lowers to a transposed-RHS matmul,
            # no explicit k transpose materialized.
            s = lax.dot_general(q, k, (((1,), (1,)), ((), ())),
                                preferred_element_type=jnp.float32)   # (T, T)
            s = jnp.where(causal, s, -1e30)                    # large finite, NaN-safe

            m = jnp.max(s, axis=-1, keepdims=True)
            e = jnp.exp(s - m)
            denom = jnp.sum(e, axis=-1, keepdims=True)
            # EUP approximate reciprocal only on the low-precision fast path; the f32
            # path keeps the exact reciprocal for a tight correctness check.
            p = e * pl.reciprocal(denom, approx=not exact)

            pv = jnp.dot(p.astype(compute_dtype), v,
                         preferred_element_type=jnp.float32)   # (T, hs)

            # Stage into the (bb*T, H*hs) slab so the output projection becomes ONE
            # K = H*hs gemm instead of H K=hs gemms + H accumulator RMW passes.
            pv_ref[r0:r0 + T, h * hs:(h + 1) * hs] = pv.astype(compute_dtype)

    # Single output projection for the whole batch block + one bias add.
    out = jnp.dot(pv_ref[...], wp_ref[...],
                  preferred_element_type=jnp.float32)          # (bb*T, C)
    out = out + bp_ref[...].astype(jnp.float32)                # (1, C) broadcasts
    o_ref[...] = out.astype(o_ref.dtype)


def prepare_mha_params(wq, wk, wv, wp, bp, *, compute_dtype=jnp.bfloat16):
    """One-time parameter preparation (hoisted out of the per-call hot path).

    wq/wk/wv: (H, C, hs)  (per-head Linear.weight.T); wp: (H*hs, C); bp: (1, C).
    Returns (wqkv, wp_c, bp_f32):
      - wqkv: (C, 3*H*hs) fused lane-dense Q|K|V weights with the C**-0.5 score
        scale folded into the Q columns, cast to compute_dtype.
      - wp_c: output-projection weights cast to compute_dtype.
      - bp_f32: bias kept in f32 (added after the f32-accumulated gemm).
    """
    H, C, hs = wq.shape
    scale = jnp.asarray(C, jnp.float32) ** -0.5
    wq_f = jnp.transpose(wq, (1, 0, 2)).reshape(C, H * hs) * scale
    wk_f = jnp.transpose(wk, (1, 0, 2)).reshape(C, H * hs)
    wv_f = jnp.transpose(wv, (1, 0, 2)).reshape(C, H * hs)
    wqkv = jnp.concatenate([wq_f, wk_f, wv_f], axis=1).astype(compute_dtype)
    return wqkv, wp.astype(compute_dtype), bp.astype(jnp.float32)


def multi_head_attention(x, wqkv, wp, bp, *, num_heads, head_size,
                         batch_block=None, compute_dtype=None):
    """x: (B, T, C) in f32 or bf16 (bf16 halves the HBM activation streams);
    wqkv/wp/bp from prepare_mha_params.  Output dtype follows x."""
    B, T, C = x.shape
    H, hs = num_heads, head_size
    if compute_dtype is None:
        compute_dtype = wqkv.dtype

    if batch_block is None:
        # Whole batch per grid step while keeping MXU M = bb*T <= 256.
        bb = max(1, min(B, 256 // max(T, 1)))
        while B % bb:
            bb -= 1
    else:
        bb = batch_block
    assert B % bb == 0, "batch_block must divide B"
    grid_b = B // bb

    # Metadata-only reshape: present a lane-dense (B*T, C) slab so the two big gemms
    # run with M = bb*T rows per grid step.
    x2 = x.reshape(B * T, C)

    kernel = functools.partial(_mha_kernel, num_heads=H, head_size=hs,
                               seq_len=T, batch_block=bb,
                               compute_dtype=compute_dtype)
    out2 = pl.pallas_call(
        kernel,
        out_shape=jax.ShapeDtypeStruct((B * T, C), x.dtype),
        grid=(grid_b,),
        in_specs=[
            pl.BlockSpec((bb * T, C), lambda i: (i, 0)),
            pl.BlockSpec((C, 3 * H * hs), lambda i: (0, 0)),
            pl.BlockSpec((H * hs, C), lambda i: (0, 0)),
            pl.BlockSpec((1, C), lambda i: (0, 0)),
        ],
        out_specs=pl.BlockSpec((bb * T, C), lambda i: (i, 0)),
        scratch_shapes=[pltpu.VMEM((bb * T, H * hs), compute_dtype)],
        compiler_params=pltpu.CompilerParams(
            dimension_semantics=("parallel",)),
    )(x2, wqkv, wp, bp)
    return out2.reshape(B, T, C)


def _reference(x, wq, wk, wv, wp, bp):
    """Pure-JAX (f32) reference of the PyTorch module."""
    B, T, C = x.shape
    H = wq.shape[0]
    outs = []
    for h in range(H):
        q = x @ wq[h]
        k = x @ wk[h]
        v = x @ wv[h]
        wei = (q @ jnp.swapaxes(k, -1, -2)) * C ** (-0.5)
        mask = jnp.tril(jnp.ones((T, T), dtype=bool))
        wei = jnp.where(mask, wei, -jnp.inf)
        wei = jax.nn.softmax(wei, axis=-1)
        outs.append(wei @ v)
    cat = jnp.concatenate(outs, axis=-1)
    return cat @ wp + bp[0]


if __name__ == "__main__":
    n_embd = 128
    num_heads = 4
    head_size = 32          # num_heads * head_size == n_embd
    B, T = 2, 8             # T <= block_size (64)

    key = jax.random.PRNGKey(0)
    kx, kq, kk, kv, kp, kb = jax.random.split(key, 6)

    x = jax.random.normal(kx, (B, T, n_embd), dtype=jnp.float32)
    # Deterministic synthetic parameters (Linear.weight.T layout), small scale.
    wq = jax.random.normal(kq, (num_heads, n_embd, head_size), dtype=jnp.float32) * 0.05
    wk = jax.random.normal(kk, (num_heads, n_embd, head_size), dtype=jnp.float32) * 0.05
    wv = jax.random.normal(kv, (num_heads, n_embd, head_size), dtype=jnp.float32) * 0.05
    wp = jax.random.normal(kp, (num_heads * head_size, n_embd), dtype=jnp.float32) * 0.05
    bp = jax.random.normal(kb, (1, n_embd), dtype=jnp.float32) * 0.05

    ref = _reference(x, wq, wk, wv, wp, bp)

    # Full-precision compute path: tight correctness check (exact reciprocal).
    wqkv32, wp32, bp32 = prepare_mha_params(wq, wk, wv, wp, bp,
                                            compute_dtype=jnp.float32)
    out_f32 = jax.block_until_ready(
        multi_head_attention(x, wqkv32, wp32, bp32,
                             num_heads=num_heads, head_size=head_size))
    assert out_f32.shape == (B, T, n_embd)
    assert jnp.allclose(out_f32, ref, atol=2e-3, rtol=2e-3), "f32 path mismatch vs reference"

    # bf16 MXU fast path (good on v5e/v6e/v7x): bf16 activations end-to-end,
    # f32 softmax + accumulation.  Weight prep done once, outside the call.
    wqkv16, wp16, bp16 = prepare_mha_params(wq, wk, wv, wp, bp,
                                            compute_dtype=jnp.bfloat16)
    x_bf16 = x.astype(jnp.bfloat16)
    out_bf16 = jax.block_until_ready(
        multi_head_attention(x_bf16, wqkv16, wp16, bp16,
                             num_heads=num_heads, head_size=head_size))
    assert out_bf16.shape == (B, T, n_embd)
    assert out_bf16.dtype == jnp.bfloat16
    assert jnp.allclose(out_bf16.astype(jnp.float32), ref, atol=6e-2, rtol=6e-2), \
        "bf16 path mismatch vs reference"

    print("KERNEL_OK")
</pallas_src>

<mosaic_0001>
module attributes {stable_mosaic.version = 11 : i64} {
  func.func @_mha_kernel(%arg0: i32, %arg1: memref<16x128xf32, #tpu.memory_space<vmem>>, %arg2: memref<128x384xf32, #tpu.memory_space<vmem>>, %arg3: memref<128x128xf32, #tpu.memory_space<vmem>>, %arg4: memref<1x128xf32, #tpu.memory_space<vmem>>, %arg5: memref<16x128xf32, #tpu.memory_space<vmem>>, %arg6: memref<16x128xf32, #tpu.memory_space<vmem>>) attributes {dimension_semantics = [#tpu.dimension_semantics<parallel>], iteration_bounds = array<i64: 1>, scalar_prefetch = 0 : i64, scratch_operands = 1 : i64, tpu.core_type = #tpu.core_type<tc>, window_params = [{transform_indices = @transform_0, window_bounds = array<i64: 16, 128>}, {pipeline_mode = #tpu.pipeline_mode<synchronous>, transform_indices = @transform_1, window_bounds = array<i64: 128, 384>}, {pipeline_mode = #tpu.pipeline_mode<synchronous>, transform_indices = @transform_2, window_bounds = array<i64: 128, 128>}, {pipeline_mode = #tpu.pipeline_mode<synchronous>, transform_indices = @transform_3, window_bounds = array<i64: 1, 128>}, {transform_indices = @transform_4, window_bounds = array<i64: 16, 128>}]} {
    %c0 = arith.constant 0 : index
    %c0_0 = arith.constant 0 : index
    %0 = vector.load %arg1[%c0, %c0_0] : memref<16x128xf32, #tpu.memory_space<vmem>>, vector<16x128xf32>
    %c0_1 = arith.constant 0 : index
    %c0_2 = arith.constant 0 : index
    %1 = vector.load %arg2[%c0_1, %c0_2] : memref<128x384xf32, #tpu.memory_space<vmem>>, vector<128x384xf32>
    %cst = arith.constant dense<0.000000e+00> : vector<16x384xf32>
    %2 = tpu.matmul %0, %1, %cst {dimension_numbers = #tpu.dot_dimension_numbers<[1], [0], [0], [1], [0, 0, 1, 1], [], []>} : vector<16x128xf32>, vector<128x384xf32>, vector<16x384xf32> -> vector<16x384xf32>
    %3 = tpu.iota {dimensions = array<i32: 0>} : vector<8x8xi32>
    %4 = tpu.iota {dimensions = array<i32: 1>} : vector<8x8xi32>
    %5 = arith.cmpi sle, %4, %3 : vector<8x8xi32>
    %6 = vector.extract_strided_slice %2 {offsets = [0, 0], sizes = [8, 32], strides = [1, 1]} : vector<16x384xf32> to vector<8x32xf32>
    %7 = vector.extract_strided_slice %2 {offsets = [0, 128], sizes = [8, 32], strides = [1, 1]} : vector<16x384xf32> to vector<8x32xf32>
    %8 = vector.extract_strided_slice %2 {offsets = [0, 256], sizes = [8, 32], strides = [1, 1]} : vector<16x384xf32> to vector<8x32xf32>
    %cst_3 = arith.constant dense<0.000000e+00> : vector<8x8xf32>
    %9 = tpu.matmul %6, %7, %cst_3 {dimension_numbers = #tpu.dot_dimension_numbers<[1], [1], [0], [0], [0, 0, 1, 0], [], []>} : vector<8x32xf32>, vector<8x32xf32>, vector<8x8xf32> -> vector<8x8xf32>
    %cst_4 = arith.constant -1.000000e+30 : f32
    %10 = vector.broadcast %cst_4 : f32 to vector<8x8xf32>
    %11 = arith.select %5, %9, %10 : vector<8x8xi1>, vector<8x8xf32>
    %cst_5 = arith.constant dense<0xFF800000> : vector<8xf32>
    %12 = vector.multi_reduction <maximumf>, %11, %cst_5 [1] : vector<8x8xf32> to vector<8xf32>
    %13 = vector.shape_cast %12 : vector<8xf32> to vector<8x1xf32>
    %14 = vector.broadcast %13 : vector<8x1xf32> to vector<8x8xf32>
    %15 = arith.subf %11, %14 : vector<8x8xf32>
    %16 = math.exp %15 : vector<8x8xf32>
    %cst_6 = arith.constant dense<0.000000e+00> : vector<8xf32>
    %17 = vector.multi_reduction <add>, %16, %cst_6 [1] : vector<8x8xf32> to vector<8xf32>
    %18 = vector.shape_cast %17 : vector<8xf32> to vector<8x1xf32>
    %19 = tpu.reciprocal %18 : vector<8x1xf32> -> vector<8x1xf32>
    %20 = vector.broadcast %19 : vector<8x1xf32> to vector<8x8xf32>
    %21 = arith.mulf %16, %20 : vector<8x8xf32>
    %cst_7 = arith.constant dense<0.000000e+00> : vector<8x32xf32>
    %22 = tpu.matmul %21, %8, %cst_7 {dimension_numbers = #tpu.dot_dimension_numbers<[1], [0], [0], [1], [0, 0, 1, 1], [], []>} : vector<8x8xf32>, vector<8x32xf32>, vector<8x32xf32> -> vector<8x32xf32>
    %c0_8 = arith.constant 0 : index
    %c0_9 = arith.constant 0 : index
    %23 = vector.load %arg6[%c0_8, %c0_9] : memref<16x128xf32, #tpu.memory_space<vmem>>, vector<8x32xf32>
    tpu.vector_store %arg6[%c0_8, %c0_9], %22 {strides = array<i32>} : memref<16x128xf32, #tpu.memory_space<vmem>>, vector<8x32xf32>,
    %24 = vector.extract_strided_slice %2 {offsets = [0, 32], sizes = [8, 32], strides = [1, 1]} : vector<16x384xf32> to vector<8x32xf32>
    %25 = vector.extract_strided_slice %2 {offsets = [0, 160], sizes = [8, 32], strides = [1, 1]} : vector<16x384xf32> to vector<8x32xf32>
    %26 = vector.extract_strided_slice %2 {offsets = [0, 288], sizes = [8, 32], strides = [1, 1]} : vector<16x384xf32> to vector<8x32xf32>
    %cst_10 = arith.constant dense<0.000000e+00> : vector<8x8xf32>
    %27 = tpu.matmul %24, %25, %cst_10 {dimension_numbers = #tpu.dot_dimension_numbers<[1], [1], [0], [0], [0, 0, 1, 0], [], []>} : vector<8x32xf32>, vector<8x32xf32>, vector<8x8xf32> -> vector<8x8xf32>
    %cst_11 = arith.constant -1.000000e+30 : f32
    %28 = vector.broadcast %cst_11 : f32 to vector<8x8xf32>
    %29 = arith.select %5, %27, %28 : vector<8x8xi1>, vector<8x8xf32>
    %cst_12 = arith.constant dense<0xFF800000> : vector<8xf32>
    %30 = vector.multi_reduction <maximumf>, %29, %cst_12 [1] : vector<8x8xf32> to vector<8xf32>
    %31 = vector.shape_cast %30 : vector<8xf32> to vector<8x1xf32>
    %32 = vector.broadcast %31 : vector<8x1xf32> to vector<8x8xf32>
    %33 = arith.subf %29, %32 : vector<8x8xf32>
    %34 = math.exp %33 : vector<8x8xf32>
    %cst_13 = arith.constant dense<0.000000e+00> : vector<8xf32>
    %35 = vector.multi_reduction <add>, %34, %cst_13 [1] : vector<8x8xf32> to vector<8xf32>
    %36 = vector.shape_cast %35 : vector<8xf32> to vector<8x1xf32>
    %37 = tpu.reciprocal %36 : vector<8x1xf32> -> vector<8x1xf32>
    %38 = vector.broadcast %37 : vector<8x1xf32> to vector<8x8xf32>
    %39 = arith.mulf %34, %38 : vector<8x8xf32>
    %cst_14 = arith.constant dense<0.000000e+00> : vector<8x32xf32>
    %40 = tpu.matmul %39, %26, %cst_14 {dimension_numbers = #tpu.dot_dimension_numbers<[1], [0], [0], [1], [0, 0, 1, 1], [], []>} : vector<8x8xf32>, vector<8x32xf32>, vector<8x32xf32> -> vector<8x32xf32>
    %c0_15 = arith.constant 0 : index
    %c32 = arith.constant 32 : index
    %41 = vector.load %arg6[%c0_15, %c32] : memref<16x128xf32, #tpu.memory_space<vmem>>, vector<8x32xf32>
    tpu.vector_store %arg6[%c0_15, %c32], %40 {strides = array<i32>} : memref<16x128xf32, #tpu.memory_space<vmem>>, vector<8x32xf32>,
    %42 = vector.extract_strided_slice %2 {offsets = [0, 64], sizes = [8, 32], strides = [1, 1]} : vector<16x384xf32> to vector<8x32xf32>
    %43 = vector.extract_strided_slice %2 {offsets = [0, 192], sizes = [8, 32], strides = [1, 1]} : vector<16x384xf32> to vector<8x32xf32>
    %44 = vector.extract_strided_slice %2 {offsets = [0, 320], sizes = [8, 32], strides = [1, 1]} : vector<16x384xf32> to vector<8x32xf32>
    %cst_16 = arith.constant dense<0.000000e+00> : vector<8x8xf32>
    %45 = tpu.matmul %42, %43, %cst_16 {dimension_numbers = #tpu.dot_dimension_numbers<[1], [1], [0], [0], [0, 0, 1, 0], [], []>} : vector<8x32xf32>, vector<8x32xf32>, vector<8x8xf32> -> vector<8x8xf32>
    %cst_17 = arith.constant -1.000000e+30 : f32
    %46 = vector.broadcast %cst_17 : f32 to vector<8x8xf32>
    %47 = arith.select %5, %45, %46 : vector<8x8xi1>, vector<8x8xf32>
    %cst_18 = arith.constant dense<0xFF800000> : vector<8xf32>
    %48 = vector.multi_reduction <maximumf>, %47, %cst_18 [1] : vector<8x8xf32> to vector<8xf32>
    %49 = vector.shape_cast %48 : vector<8xf32> to vector<8x1xf32>
    %50 = vector.broadcast %49 : vector<8x1xf32> to vector<8x8xf32>
    %51 = arith.subf %47, %50 : vector<8x8xf32>
    %52 = math.exp %51 : vector<8x8xf32>
    %cst_19 = arith.constant dense<0.000000e+00> : vector<8xf32>
    %53 = vector.multi_reduction <add>, %52, %cst_19 [1] : vector<8x8xf32> to vector<8xf32>
    %54 = vector.shape_cast %53 : vector<8xf32> to vector<8x1xf32>
    %55 = tpu.reciprocal %54 : vector<8x1xf32> -> vector<8x1xf32>
    %56 = vector.broadcast %55 : vector<8x1xf32> to vector<8x8xf32>
    %57 = arith.mulf %52, %56 : vector<8x8xf32>
    %cst_20 = arith.constant dense<0.000000e+00> : vector<8x32xf32>
    %58 = tpu.matmul %57, %44, %cst_20 {dimension_numbers = #tpu.dot_dimension_numbers<[1], [0], [0], [1], [0, 0, 1, 1], [], []>} : vector<8x8xf32>, vector<8x32xf32>, vector<8x32xf32> -> vector<8x32xf32>
    %c0_21 = arith.constant 0 : index
    %c64 = arith.constant 64 : index
    %59 = vector.load %arg6[%c0_21, %c64] : memref<16x128xf32, #tpu.memory_space<vmem>>, vector<8x32xf32>
    tpu.vector_store %arg6[%c0_21, %c64], %58 {strides = array<i32>} : memref<16x128xf32, #tpu.memory_space<vmem>>, vector<8x32xf32>,
    %60 = vector.extract_strided_slice %2 {offsets = [0, 96], sizes = [8, 32], strides = [1, 1]} : vector<16x384xf32> to vector<8x32xf32>
    %61 = vector.extract_strided_slice %2 {offsets = [0, 224], sizes = [8, 32], strides = [1, 1]} : vector<16x384xf32> to vector<8x32xf32>
    %62 = vector.extract_strided_slice %2 {offsets = [0, 352], sizes = [8, 32], strides = [1, 1]} : vector<16x384xf32> to vector<8x32xf32>
    %cst_22 = arith.constant dense<0.000000e+00> : vector<8x8xf32>
    %63 = tpu.matmul %60, %61, %cst_22 {dimension_numbers = #tpu.dot_dimension_numbers<[1], [1], [0], [0], [0, 0, 1, 0], [], []>} : vector<8x32xf32>, vector<8x32xf32>, vector<8x8xf32> -> vector<8x8xf32>
    %cst_23 = arith.constant -1.000000e+30 : f32
    %64 = vector.broadcast %cst_23 : f32 to vector<8x8xf32>
    %65 = arith.select %5, %63, %64 : vector<8x8xi1>, vector<8x8xf32>
    %cst_24 = arith.constant dense<0xFF800000> : vector<8xf32>
    %66 = vector.multi_reduction <maximumf>, %65, %cst_24 [1] : vector<8x8xf32> to vector<8xf32>
    %67 = vector.shape_cast %66 : vector<8xf32> to vector<8x1xf32>
    %68 = vector.broadcast %67 : vector<8x1xf32> to vector<8x8xf32>
    %69 = arith.subf %65, %68 : vector<8x8xf32>
    %70 = math.exp %69 : vector<8x8xf32>
    %cst_25 = arith.constant dense<0.000000e+00> : vector<8xf32>
    %71 = vector.multi_reduction <add>, %70, %cst_25 [1] : vector<8x8xf32> to vector<8xf32>
    %72 = vector.shape_cast %71 : vector<8xf32> to vector<8x1xf32>
    %73 = tpu.reciprocal %72 : vector<8x1xf32> -> vector<8x1xf32>
    %74 = vector.broadcast %73 : vector<8x1xf32> to vector<8x8xf32>
    %75 = arith.mulf %70, %74 : vector<8x8xf32>
    %cst_26 = arith.constant dense<0.000000e+00> : vector<8x32xf32>
    %76 = tpu.matmul %75, %62, %cst_26 {dimension_numbers = #tpu.dot_dimension_numbers<[1], [0], [0], [1], [0, 0, 1, 1], [], []>} : vector<8x8xf32>, vector<8x32xf32>, vector<8x32xf32> -> vector<8x32xf32>
    %c0_27 = arith.constant 0 : index
    %c96 = arith.constant 96 : index
    %77 = vector.load %arg6[%c0_27, %c96] : memref<16x128xf32, #tpu.memory_space<vmem>>, vector<8x32xf32>
    tpu.vector_store %arg6[%c0_27, %c96], %76 {strides = array<i32>} : memref<16x128xf32, #tpu.memory_space<vmem>>, vector<8x32xf32>,
    %78 = vector.extract_strided_slice %2 {offsets = [8, 0], sizes = [8, 32], strides = [1, 1]} : vector<16x384xf32> to vector<8x32xf32>
    %79 = vector.extract_strided_slice %2 {offsets = [8, 128], sizes = [8, 32], strides = [1, 1]} : vector<16x384xf32> to vector<8x32xf32>
    %80 = vector.extract_strided_slice %2 {offsets = [8, 256], sizes = [8, 32], strides = [1, 1]} : vector<16x384xf32> to vector<8x32xf32>
    %cst_28 = arith.constant dense<0.000000e+00> : vector<8x8xf32>
    %81 = tpu.matmul %78, %79, %cst_28 {dimension_numbers = #tpu.dot_dimension_numbers<[1], [1], [0], [0], [0, 0, 1, 0], [], []>} : vector<8x32xf32>, vector<8x32xf32>, vector<8x8xf32> -> vector<8x8xf32>
    %cst_29 = arith.constant -1.000000e+30 : f32
    %82 = vector.broadcast %cst_29 : f32 to vector<8x8xf32>
    %83 = arith.select %5, %81, %82 : vector<8x8xi1>, vector<8x8xf32>
    %cst_30 = arith.constant dense<0xFF800000> : vector<8xf32>
    %84 = vector.multi_reduction <maximumf>, %83, %cst_30 [1] : vector<8x8xf32> to vector<8xf32>
    %85 = vector.shape_cast %84 : vector<8xf32> to vector<8x1xf32>
    %86 = vector.broadcast %85 : vector<8x1xf32> to vector<8x8xf32>
    %87 = arith.subf %83, %86 : vector<8x8xf32>
    %88 = math.exp %87 : vector<8x8xf32>
    %cst_31 = arith.constant dense<0.000000e+00> : vector<8xf32>
    %89 = vector.multi_reduction <add>, %88, %cst_31 [1] : vector<8x8xf32> to vector<8xf32>
    %90 = vector.shape_cast %89 : vector<8xf32> to vector<8x1xf32>
    %91 = tpu.reciprocal %90 : vector<8x1xf32> -> vector<8x1xf32>
    %92 = vector.broadcast %91 : vector<8x1xf32> to vector<8x8xf32>
    %93 = arith.mulf %88, %92 : vector<8x8xf32>
    %cst_32 = arith.constant dense<0.000000e+00> : vector<8x32xf32>
    %94 = tpu.matmul %93, %80, %cst_32 {dimension_numbers = #tpu.dot_dimension_numbers<[1], [0], [0], [1], [0, 0, 1, 1], [], []>} : vector<8x8xf32>, vector<8x32xf32>, vector<8x32xf32> -> vector<8x32xf32>
    %c8 = arith.constant 8 : index
    %c0_33 = arith.constant 0 : index
    %95 = vector.load %arg6[%c8, %c0_33] : memref<16x128xf32, #tpu.memory_space<vmem>>, vector<8x32xf32>
    tpu.vector_store %arg6[%c8, %c0_33], %94 {strides = array<i32>} : memref<16x128xf32, #tpu.memory_space<vmem>>, vector<8x32xf32>,
    %96 = vector.extract_strided_slice %2 {offsets = [8, 32], sizes = [8, 32], strides = [1, 1]} : vector<16x384xf32> to vector<8x32xf32>
    %97 = vector.extract_strided_slice %2 {offsets = [8, 160], sizes = [8, 32], strides = [1, 1]} : vector<16x384xf32> to vector<8x32xf32>
    %98 = vector.extract_strided_slice %2 {offsets = [8, 288], sizes = [8, 32], strides = [1, 1]} : vector<16x384xf32> to vector<8x32xf32>
    %cst_34 = arith.constant dense<0.000000e+00> : vector<8x8xf32>
    %99 = tpu.matmul %96, %97, %cst_34 {dimension_numbers = #tpu.dot_dimension_numbers<[1], [1], [0], [0], [0, 0, 1, 0], [], []>} : vector<8x32xf32>, vector<8x32xf32>, vector<8x8xf32> -> vector<8x8xf32>
    %cst_35 = arith.constant -1.000000e+30 : f32
    %100 = vector.broadcast %cst_35 : f32 to vector<8x8xf32>
    %101 = arith.select %5, %99, %100 : vector<8x8xi1>, vector<8x8xf32>
    %cst_36 = arith.constant dense<0xFF800000> : vector<8xf32>
    %102 = vector.multi_reduction <maximumf>, %101, %cst_36 [1] : vector<8x8xf32> to vector<8xf32>
    %103 = vector.shape_cast %102 : vector<8xf32> to vector<8x1xf32>
    %104 = vector.broadcast %103 : vector<8x1xf32> to vector<8x8xf32>
    %105 = arith.subf %101, %104 : vector<8x8xf32>
    %106 = math.exp %105 : vector<8x8xf32>
    %cst_37 = arith.constant dense<0.000000e+00> : vector<8xf32>
    %107 = vector.multi_reduction <add>, %106, %cst_37 [1] : vector<8x8xf32> to vector<8xf32>
    %108 = vector.shape_cast %107 : vector<8xf32> to vector<8x1xf32>
    %109 = tpu.reciprocal %108 : vector<8x1xf32> -> vector<8x1xf32>
    %110 = vector.broadcast %109 : vector<8x1xf32> to vector<8x8xf32>
    %111 = arith.mulf %106, %110 : vector<8x8xf32>
    %cst_38 = arith.constant dense<0.000000e+00> : vector<8x32xf32>
    %112 = tpu.matmul %111, %98, %cst_38 {dimension_numbers = #tpu.dot_dimension_numbers<[1], [0], [0], [1], [0, 0, 1, 1], [], []>} : vector<8x8xf32>, vector<8x32xf32>, vector<8x32xf32> -> vector<8x32xf32>
    %c8_39 = arith.constant 8 : index
    %c32_40 = arith.constant 32 : index
    %113 = vector.load %arg6[%c8_39, %c32_40] : memref<16x128xf32, #tpu.memory_space<vmem>>, vector<8x32xf32>
    tpu.vector_store %arg6[%c8_39, %c32_40], %112 {strides = array<i32>} : memref<16x128xf32, #tpu.memory_space<vmem>>, vector<8x32xf32>,
    %114 = vector.extract_strided_slice %2 {offsets = [8, 64], sizes = [8, 32], strides = [1, 1]} : vector<16x384xf32> to vector<8x32xf32>
    %115 = vector.extract_strided_slice %2 {offsets = [8, 192], sizes = [8, 32], strides = [1, 1]} : vector<16x384xf32> to vector<8x32xf32>
    %116 = vector.extract_strided_slice %2 {offsets = [8, 320], sizes = [8, 32], strides = [1, 1]} : vector<16x384xf32> to vector<8x32xf32>
    %cst_41 = arith.constant dense<0.000000e+00> : vector<8x8xf32>
    %117 = tpu.matmul %114, %115, %cst_41 {dimension_numbers = #tpu.dot_dimension_numbers<[1], [1], [0], [0], [0, 0, 1, 0], [], []>} : vector<8x32xf32>, vector<8x32xf32>, vector<8x8xf32> -> vector<8x8xf32>
    %cst_42 = arith.constant -1.000000e+30 : f32
    %118 = vector.broadcast %cst_42 : f32 to vector<8x8xf32>
    %119 = arith.select %5, %117, %118 : vector<8x8xi1>, vector<8x8xf32>
    %cst_43 = arith.constant dense<0xFF800000> : vector<8xf32>
    %120 = vector.multi_reduction <maximumf>, %119, %cst_43 [1] : vector<8x8xf32> to vector<8xf32>
    %121 = vector.shape_cast %120 : vector<8xf32> to vector<8x1xf32>
    %122 = vector.broadcast %121 : vector<8x1xf32> to vector<8x8xf32>
    %123 = arith.subf %119, %122 : vector<8x8xf32>
    %124 = math.exp %123 : vector<8x8xf32>
    %cst_44 = arith.constant dense<0.000000e+00> : vector<8xf32>
    %125 = vector.multi_reduction <add>, %124, %cst_44 [1] : vector<8x8xf32> to vector<8xf32>
    %126 = vector.shape_cast %125 : vector<8xf32> to vector<8x1xf32>
    %127 = tpu.reciprocal %126 : vector<8x1xf32> -> vector<8x1xf32>
    %128 = vector.broadcast %127 : vector<8x1xf32> to vector<8x8xf32>
    %129 = arith.mulf %124, %128 : vector<8x8xf32>
    %cst_45 = arith.constant dense<0.000000e+00> : vector<8x32xf32>
    %130 = tpu.matmul %129, %116, %cst_45 {dimension_numbers = #tpu.dot_dimension_numbers<[1], [0], [0], [1], [0, 0, 1, 1], [], []>} : vector<8x8xf32>, vector<8x32xf32>, vector<8x32xf32> -> vector<8x32xf32>
    %c8_46 = arith.constant 8 : index
    %c64_47 = arith.constant 64 : index
    %131 = vector.load %arg6[%c8_46, %c64_47] : memref<16x128xf32, #tpu.memory_space<vmem>>, vector<8x32xf32>
    tpu.vector_store %arg6[%c8_46, %c64_47], %130 {strides = array<i32>} : memref<16x128xf32, #tpu.memory_space<vmem>>, vector<8x32xf32>,
    %132 = vector.extract_strided_slice %2 {offsets = [8, 96], sizes = [8, 32], strides = [1, 1]} : vector<16x384xf32> to vector<8x32xf32>
    %133 = vector.extract_strided_slice %2 {offsets = [8, 224], sizes = [8, 32], strides = [1, 1]} : vector<16x384xf32> to vector<8x32xf32>
    %134 = vector.extract_strided_slice %2 {offsets = [8, 352], sizes = [8, 32], strides = [1, 1]} : vector<16x384xf32> to vector<8x32xf32>
    %cst_48 = arith.constant dense<0.000000e+00> : vector<8x8xf32>
    %135 = tpu.matmul %132, %133, %cst_48 {dimension_numbers = #tpu.dot_dimension_numbers<[1], [1], [0], [0], [0, 0, 1, 0], [], []>} : vector<8x32xf32>, vector<8x32xf32>, vector<8x8xf32> -> vector<8x8xf32>
    %cst_49 = arith.constant -1.000000e+30 : f32
    %136 = vector.broadcast %cst_49 : f32 to vector<8x8xf32>
    %137 = arith.select %5, %135, %136 : vector<8x8xi1>, vector<8x8xf32>
    %cst_50 = arith.constant dense<0xFF800000> : vector<8xf32>
    %138 = vector.multi_reduction <maximumf>, %137, %cst_50 [1] : vector<8x8xf32> to vector<8xf32>
    %139 = vector.shape_cast %138 : vector<8xf32> to vector<8x1xf32>
    %140 = vector.broadcast %139 : vector<8x1xf32> to vector<8x8xf32>
    %141 = arith.subf %137, %140 : vector<8x8xf32>
    %142 = math.exp %141 : vector<8x8xf32>
    %cst_51 = arith.constant dense<0.000000e+00> : vector<8xf32>
    %143 = vector.multi_reduction <add>, %142, %cst_51 [1] : vector<8x8xf32> to vector<8xf32>
    %144 = vector.shape_cast %143 : vector<8xf32> to vector<8x1xf32>
    %145 = tpu.reciprocal %144 : vector<8x1xf32> -> vector<8x1xf32>
    %146 = vector.broadcast %145 : vector<8x1xf32> to vector<8x8xf32>
    %147 = arith.mulf %142, %146 : vector<8x8xf32>
    %cst_52 = arith.constant dense<0.000000e+00> : vector<8x32xf32>
    %148 = tpu.matmul %147, %134, %cst_52 {dimension_numbers = #tpu.dot_dimension_numbers<[1], [0], [0], [1], [0, 0, 1, 1], [], []>} : vector<8x8xf32>, vector<8x32xf32>, vector<8x32xf32> -> vector<8x32xf32>
    %c8_53 = arith.constant 8 : index
    %c96_54 = arith.constant 96 : index
    %149 = vector.load %arg6[%c8_53, %c96_54] : memref<16x128xf32, #tpu.memory_space<vmem>>, vector<8x32xf32>
    tpu.vector_store %arg6[%c8_53, %c96_54], %148 {strides = array<i32>} : memref<16x128xf32, #tpu.memory_space<vmem>>, vector<8x32xf32>,
    %c0_55 = arith.constant 0 : index
    %c0_56 = arith.constant 0 : index
    %150 = vector.load %arg6[%c0_55, %c0_56] : memref<16x128xf32, #tpu.memory_space<vmem>>, vector<16x128xf32>
    %c0_57 = arith.constant 0 : index
    %c0_58 = arith.constant 0 : index
    %151 = vector.load %arg3[%c0_57, %c0_58] : memref<128x128xf32, #tpu.memory_space<vmem>>, vector<128x128xf32>
    %cst_59 = arith.constant dense<0.000000e+00> : vector<16x128xf32>
    %152 = tpu.matmul %150, %151, %cst_59 {dimension_numbers = #tpu.dot_dimension_numbers<[1], [0], [0], [1], [0, 0, 1, 1], [], []>} : vector<16x128xf32>, vector<128x128xf32>, vector<16x128xf32> -> vector<16x128xf32>
    %c0_60 = arith.constant 0 : index
    %c0_61 = arith.constant 0 : index
    %153 = vector.load %arg4[%c0_60, %c0_61] : memref<1x128xf32, #tpu.memory_space<vmem>>, vector<1x128xf32>
    %154 = vector.broadcast %153 : vector<1x128xf32> to vector<16x128xf32>
    %155 = arith.addf %152, %154 : vector<16x128xf32>
    %c0_62 = arith.constant 0 : index
    %c0_63 = arith.constant 0 : index
    %156 = vector.load %arg5[%c0_62, %c0_63] : memref<16x128xf32, #tpu.memory_space<vmem>>, vector<16x128xf32>
    tpu.vector_store %arg5[%c0_62, %c0_63], %155 {strides = array<i32>} : memref<16x128xf32, #tpu.memory_space<vmem>>, vector<16x128xf32>,
    return
  }
  func.func @transform_0(%arg0: i32) -> (i32, i32) {
    %c0_i32 = arith.constant 0 : i32
    %c0_i32_0 = arith.constant 0 : i32
    return %arg0, %c0_i32 : i32, i32
  }
  func.func @transform_1(%arg0: i32) -> (i32, i32) {
    %c0_i32 = arith.constant 0 : i32
    %c0_i32_0 = arith.constant 0 : i32
    %c0_i32_1 = arith.constant 0 : i32
    return %c0_i32, %c0_i32_0 : i32, i32
  }
  func.func @transform_2(%arg0: i32) -> (i32, i32) {
    %c0_i32 = arith.constant 0 : i32
    %c0_i32_0 = arith.constant 0 : i32
    %c0_i32_1 = arith.constant 0 : i32
    return %c0_i32, %c0_i32_0 : i32, i32
  }
  func.func @transform_3(%arg0: i32) -> (i32, i32) {
    %c0_i32 = arith.constant 0 : i32
    %c0_i32_0 = arith.constant 0 : i32
    %c0_i32_1 = arith.constant 0 : i32
    return %c0_i32, %c0_i32_0 : i32, i32
  }
  func.func @transform_4(%arg0: i32) -> (i32, i32) {
    %c0_i32 = arith.constant 0 : i32
    %c0_i32_0 = arith.constant 0 : i32
    return %arg0, %c0_i32 : i32, i32
  }
}

</mosaic_0001>

<llo_original>
// kernel: tpu_custom_call.1
$region0: #{tpu_custom_call.1}
  #allocation0 [shape = 'u32[]', space=smem, size = 0x4, offset = 0x4, fixed_abs, tag = 'smem constant byte address 0x4 - core index']
  #allocation1 [shape = 'u32[144,128]{1,0:T(1,128)}', space=vmem, size = 0x12000, scoped, tag = 'internal scratch']
  #allocation2 [shape = 'f32[16,128]{1,0:T(8,128)}', space=vmem, size = 0x2000, scoped, tag = 'scratch operand']
  %s0 = inlined_call_operand.hbm [shape: f32[16,128], index: 0, kind: input, shape index: {}]
  %s1 = inlined_call_operand.hbm [shape: f32[128,384], index: 1, kind: input, shape index: {}]
  %s2 = inlined_call_operand.hbm [shape: f32[128,128], index: 2, kind: input, shape index: {}]
  %s3 = inlined_call_operand.vmem [shape: f32[1,128], index: 3, kind: input, shape index: {}]
  %s4 = inlined_call_operand.hbm [shape: f32[16,128], index: 4, kind: output, shape index: {}]
  %s5 = sld [smem:[#allocation0]]
  $region38: #{tpu_custom_call.1} parent=0
    _
  %s7 = ssub.s32 1, %s5
  %s8 = scalar_select 0, %s7, %s5
  $region1: #{tpu_custom_call.1} parent=0
    #allocation3 [shape = 'u8[8192]{0}', space=vmem, size = 0x2000, scoped, tag = 'input window, operand 0, single buffered']
    #allocation4 [shape = 's32[1]{0}', space=sflag, size = 0x4, scoped, tag = 'scoped memory for tpu_custom_call.1']
    #allocation5 [shape = 's32[1]{0}', space=sflag, size = 0x4, scoped, tag = 'scoped memory for tpu_custom_call.1']
    #allocation6 [shape = 'u8[196608]{0}', space=vmem, size = 0x30000, scoped, tag = 'input window, operand 1, single buffered']
    #allocation7 [shape = 's32[1]{0}', space=sflag, size = 0x4, scoped, tag = 'scoped memory for tpu_custom_call.1']
    #allocation8 [shape = 'u8[65536]{0}', space=vmem, size = 0x10000, scoped, tag = 'input window, operand 2, single buffered']
    #allocation9 [shape = 'u8[8192]{0}', space=vmem, size = 0x2000, scoped, tag = 'output window, operand 0, single buffered']
    %9 = vsyncpa [#allocation4], 0
    %10 = vsyncpa [#allocation7], 0
    %11 = vsyncpa [#allocation5], 0
    // Predicated region
    $region2: #{tpu_custom_call.1} parent=1 // pred_check
      _
    $region3: #{tpu_custom_call.1} parent=1 // pred_check_branch
      %13 = sbr.rel (0) target = $region5
    $region4: #{tpu_custom_call.1} parent=1 // pred_region
      %s15 = ssub.s32 256, 256
      %16 = vsyncadd [#allocation4], %s15
      %s17 = sshll.u32 [#allocation3], 4
      %s18 = int_to_ptr.vmem [resolvable:$true] %s17
      %23 = dma.hbm_to_vmem [thread:$0]  %s0, 256, %s18, [#allocation4], 128, 128, 8
    $region5: #{tpu_custom_call.1} parent=1 // pred_fallthru
      _
    // Predicated region
    $region6: #{tpu_custom_call.1} parent=1 // pred_check
      _
    $region7: #{tpu_custom_call.1} parent=1 // pred_check_branch
      %25 = sbr.rel (0) target = $region9
    $region8: #{tpu_custom_call.1} parent=1 // pred_region
      %s27 = ssub.s32 6144, 6144
      %28 = vsyncadd [#allocation7], %s27
      %s29 = sshll.u32 [#allocation6], 4
      %s30 = int_to_ptr.vmem [resolvable:$true] %s29
      %35 = dma.hbm_to_vmem [thread:$0]  %s1, 6144, %s30, [#allocation7], 384, 384, 24
    $region9: #{tpu_custom_call.1} parent=1 // pred_fallthru
      _
    // Predicated region
    $region10: #{tpu_custom_call.1} parent=1 // pred_check
      _
    $region11: #{tpu_custom_call.1} parent=1 // pred_check_branch
      %37 = sbr.rel (0) target = $region13
    $region12: #{tpu_custom_call.1} parent=1 // pred_region
      %s39 = ssub.s32 2048, 2048
      %40 = vsyncadd [#allocation7], %s39
      %s41 = sshll.u32 [#allocation8], 4
      %s42 = int_to_ptr.vmem [resolvable:$true] %s41
      %47 = dma.hbm_to_vmem [thread:$0]  %s2, 2048, %s42, [#allocation7], 128, 128, 8
    $region13: #{tpu_custom_call.1} parent=1 // pred_fallthru
      _
    // Predicated region
    $region14: #{tpu_custom_call.1} parent=1 // pred_check
      _
    $region15: #{tpu_custom_call.1} parent=1 // pred_check_branch
      %49 = sbr.rel (0) target = $region17
    $region16: #{tpu_custom_call.1} parent=1 // pred_region
      _
    $region17: #{tpu_custom_call.1} parent=1 // pred_fallthru
      _
    // Predicated region
    $region18: #{tpu_custom_call.1} parent=1 // pred_check
      _
    $region19: #{tpu_custom_call.1} parent=1 // pred_check_branch
      %51 = sbr.rel (0) target = $region21
    $region20: #{tpu_custom_call.1} parent=1 // pred_region
      %52 = dma.done [#allocation4], 256
    $region21: #{tpu_custom_call.1} parent=1 // pred_fallthru
      _
    // Predicated region
    $region22: #{tpu_custom_call.1} parent=1 // pred_check
      _
    $region23: #{tpu_custom_call.1} parent=1 // pred_check_branch
      %54 = sbr.rel (0) target = $region25
    $region24: #{tpu_custom_call.1} parent=1 // pred_region
      %55 = dma.done [#allocation7], 6144
    $region25: #{tpu_custom_call.1} parent=1 // pred_fallthru
      _
    // Predicated region
    $region26: #{tpu_custom_call.1} parent=1 // pred_check
      _
    $region27: #{tpu_custom_call.1} parent=1 // pred_check_branch
      %57 = sbr.rel (0) target = $region29
    $region28: #{tpu_custom_call.1} parent=1 // pred_region
      %58 = dma.done [#allocation7], 2048
    $region29: #{tpu_custom_call.1} parent=1 // pred_fallthru
      _
    %v59 = vld [vmem:[#allocation3] sm:$0xff]
    %v60 = vld [vmem:[#allocation3 + $0x8] sm:$0xff]
    %v61 = vld [vmem:[#allocation6] sm:$0xff]
    %v62 = vld [vmem:[#allocation6 + $0x8] sm:$0xff]
    %v63 = vld [vmem:[#allocation6 + $0x10] sm:$0xff]
    %v64 = vld [vmem:[#allocation6 + $0x18] sm:$0xff]
    %v65 = vld [vmem:[#allocation6 + $0x20] sm:$0xff]
    %v66 = vld [vmem:[#allocation6 + $0x28] sm:$0xff]
    %v67 = vld [vmem:[#allocation6 + $0x30] sm:$0xff]
    %v68 = vld [vmem:[#allocation6 + $0x38] sm:$0xff]
    %v69 = vld [vmem:[#allocation6 + $0x40] sm:$0xff]
    %v70 = vld [vmem:[#allocation6 + $0x48] sm:$0xff]
    %v71 = vld [vmem:[#allocation6 + $0x50] sm:$0xff]
    %v72 = vld [vmem:[#allocation6 + $0x58] sm:$0xff]
    %v73 = vld [vmem:[#allocation6 + $0x60] sm:$0xff]
    %v74 = vld [vmem:[#allocation6 + $0x68] sm:$0xff]
    %v75 = vld [vmem:[#allocation6 + $0x70] sm:$0xff]
    %v76 = vld [vmem:[#allocation6 + $0x78] sm:$0xff]
    %v77 = vld [vmem:[#allocation6 + $0x80] sm:$0xff]
    %v78 = vld [vmem:[#allocation6 + $0x88] sm:$0xff]
    %v79 = vld [vmem:[#allocation6 + $0x90] sm:$0xff]
    %v80 = vld [vmem:[#allocation6 + $0x98] sm:$0xff]
    %v81 = vld [vmem:[#allocation6 + $0xa0] sm:$0xff]
    %v82 = vld [vmem:[#allocation6 + $0xa8] sm:$0xff]
    %v83 = vld [vmem:[#allocation6 + $0xb0] sm:$0xff]
    %v84 = vld [vmem:[#allocation6 + $0xb8] sm:$0xff]
    %v85 = vld [vmem:[#allocation6 + $0xc0] sm:$0xff]
    %v86 = vld [vmem:[#allocation6 + $0xc8] sm:$0xff]
    %v87 = vld [vmem:[#allocation6 + $0xd0] sm:$0xff]
    %v88 = vld [vmem:[#allocation6 + $0xd8] sm:$0xff]
    %v89 = vld [vmem:[#allocation6 + $0xe0] sm:$0xff]
    %v90 = vld [vmem:[#allocation6 + $0xe8] sm:$0xff]
    %v91 = vld [vmem:[#allocation6 + $0xf0] sm:$0xff]
    %v92 = vld [vmem:[#allocation6 + $0xf8] sm:$0xff]
    %v93 = vld [vmem:[#allocation6 + $0x100] sm:$0xff]
    %v94 = vld [vmem:[#allocation6 + $0x108] sm:$0xff]
    %v95 = vld [vmem:[#allocation6 + $0x110] sm:$0xff]
    %v96 = vld [vmem:[#allocation6 + $0x118] sm:$0xff]
    %v97 = vld [vmem:[#allocation6 + $0x120] sm:$0xff]
    %v98 = vld [vmem:[#allocation6 + $0x128] sm:$0xff]
    %v99 = vld [vmem:[#allocation6 + $0x130] sm:$0xff]
    %v100 = vld [vmem:[#allocation6 + $0x138] sm:$0xff]
    %v101 = vld [vmem:[#allocation6 + $0x140] sm:$0xff]
    %v102 = vld [vmem:[#allocation6 + $0x148] sm:$0xff]
    %v103 = vld [vmem:[#allocation6 + $0x150] sm:$0xff]
    %v104 = vld [vmem:[#allocation6 + $0x158] sm:$0xff]
    %v105 = vld [vmem:[#allocation6 + $0x160] sm:$0xff]
    %v106 = vld [vmem:[#allocation6 + $0x168] sm:$0xff]
    %v107 = vld [vmem:[#allocation6 + $0x170] sm:$0xff]
    %v108 = vld [vmem:[#allocation6 + $0x178] sm:$0xff]
    %109 = vmatprep.subr.mxu0 %v62
    %110 = vmatpush1.msra.mxu0 %v61
    %111 = vmatprep.subr.mxu0 %v65
    %112 = vmatpush1.msra.mxu0 %v64
    %113 = vmatprep.subr.mxu0 %v68
    %114 = vmatpush1.msra.mxu0 %v67
    %115 = vmatprep.subr.mxu0 %v71
    %116 = vmatpush1.msra.mxu0 %v70
    %117 = vmatprep.subr.mxu0 %v74
    %118 = vmatpush1.msra.mxu0 %v73
    %119 = vmatprep.subr.mxu0 %v77
    %120 = vmatpush1.msra.mxu0 %v76
    %121 = vmatprep.subr.mxu0 %v80
    %122 = vmatpush1.msra.mxu0 %v79
    %123 = vmatprep.subr.mxu0 %v83
    %124 = vmatpush1.msra.mxu0 %v82
    %125 = vmatprep.subr.mxu0 %v86
    %126 = vmatpush1.msra.mxu0 %v85
    %127 = vmatprep.subr.mxu0 %v89
    %128 = vmatpush1.msra.mxu0 %v88
    %129 = vmatprep.subr.mxu0 %v92
    %130 = vmatpush1.msra.mxu0 %v91
    %131 = vmatprep.subr.mxu0 %v95
    %132 = vmatpush1.msra.mxu0 %v94
    %133 = vmatprep.subr.mxu0 %v98
    %134 = vmatpush1.msra.mxu0 %v97
    %135 = vmatprep.subr.mxu0 %v101
    %136 = vmatpush1.msra.mxu0 %v100
    %137 = vmatprep.subr.mxu0 %v104
    %138 = vmatpush1.msra.mxu0 %v103
    %139 = vmatprep.subr.mxu0 %v107
    %140 = vmatpush1.msra.mxu0 %v106
    %141 = vmatprep.subr.mxu0 0.0
    %142 = vmatpush1.msra.mxu0 0.0
    %143 = vmatprep.subr.mxu0 0.0
    %144 = vmatpush1.msra.mxu0 0.0
    %145 = vmatprep.subr.mxu0 0.0
    %146 = vmatpush1.msra.mxu0 0.0
    %147 = vmatprep.subr.mxu0 0.0
    %148 = vmatpush1.msra.mxu0 0.0
    %149 = vmatprep.subr.mxu0 0.0
    %150 = vmatpush1.msra.mxu0 0.0
    %151 = vmatprep.subr.mxu0 0.0
    %152 = vmatpush1.msra.mxu0 0.0
    %153 = vmatprep.subr.mxu0 0.0
    %154 = vmatpush1.msra.mxu0 0.0
    %155 = vmatprep.subr.mxu0 0.0
    %156 = vmatpush1.msra.mxu0 0.0
    %157 = vmatprep.subr.mxu0 0.0
    %158 = vmatpush1.msra.mxu0 0.0
    %159 = vmatprep.subr.mxu0 0.0
    %160 = vmatpush1.msra.mxu0 0.0
    %161 = vmatprep.subr.mxu0 0.0
    %162 = vmatpush1.msra.mxu0 0.0
    %163 = vmatprep.subr.mxu0 0.0
    %164 = vmatpush1.msra.mxu0 0.0
    %165 = vmatprep.subr.mxu0 0.0
    %166 = vmatpush1.msra.mxu0 0.0
    %167 = vmatprep.subr.mxu0 0.0
    %168 = vmatpush1.msra.mxu0 0.0
    %169 = vmatprep.subr.mxu0 0.0
    %170 = vmatpush1.msra.mxu0 0.0
    %171 = vmatprep.subr.mxu0 0.0
    %172 = vmatpush1.msra.mxu0 0.0
    %173 = vmatprep.mubr.f32.mxu0 0.0
    %174 = vmatmul.mubr.f32.gmra.mrb[0].mxu0 %v59
    %v175 = vpop.f32.mrb[0].mxu0
    %v176 = vadd.f32 0.0, %v175
    %v177 = vpop.f32.mrb[0].mxu0
    %v178 = vadd.f32 0.0, %v177
    %179 = vmatprep.mubr.f32.mxu0 0.0
    %180 = vmatmul.mubr.f32.gmra.mrb[0].mxu0 %v60
    %v181 = vpop.f32.mrb[0].mxu0
    %v182 = vadd.f32 0.0, %v181
    %v183 = vpop.f32.mrb[0].mxu0
    %v184 = vadd.f32 0.0, %v183
    %185 = vdwg.mxu0
    %186 = vmatprep.subr.mxu0 0.0
    %187 = vmatpush1.msra.mxu0 %v63
    %188 = vmatprep.subr.mxu0 0.0
    %189 = vmatpush1.msra.mxu0 %v66
    %190 = vmatprep.subr.mxu0 0.0
    %191 = vmatpush1.msra.mxu0 %v69
    %192 = vmatprep.subr.mxu0 0.0
    %193 = vmatpush1.msra.mxu0 %v72
    %194 = vmatprep.subr.mxu0 0.0
    %195 = vmatpush1.msra.mxu0 %v75
    %196 = vmatprep.subr.mxu0 0.0
    %197 = vmatpush1.msra.mxu0 %v78
    %198 = vmatprep.subr.mxu0 0.0
    %199 = vmatpush1.msra.mxu0 %v81
    %200 = vmatprep.subr.mxu0 0.0
    %201 = vmatpush1.msra.mxu0 %v84
    %202 = vmatprep.subr.mxu0 0.0
    %203 = vmatpush1.msra.mxu0 %v87
    %204 = vmatprep.subr.mxu0 0.0
    %205 = vmatpush1.msra.mxu0 %v90
    %206 = vmatprep.subr.mxu0 0.0
    %207 = vmatpush1.msra.mxu0 %v93
    %208 = vmatprep.subr.mxu0 0.0
    %209 = vmatpush1.msra.mxu0 %v96
    %210 = vmatprep.subr.mxu0 0.0
    %211 = vmatpush1.msra.mxu0 %v99
    %212 = vmatprep.subr.mxu0 0.0
    %213 = vmatpush1.msra.mxu0 %v102
    %214 = vmatprep.subr.mxu0 0.0
    %215 = vmatpush1.msra.mxu0 %v105
    %216 = vmatprep.subr.mxu0 0.0
    %217 = vmatpush1.msra.mxu0 %v108
    %218 = vmatprep.subr.mxu0 0.0
    %219 = vmatpush1.msra.mxu0 0.0
    %220 = vmatprep.subr.mxu0 0.0
    %221 = vmatpush1.msra.mxu0 0.0
    %222 = vmatprep.subr.mxu0 0.0
    %223 = vmatpush1.msra.mxu0 0.0
    %224 = vmatprep.subr.mxu0 0.0
    %225 = vmatpush1.msra.mxu0 0.0
    %226 = vmatprep.subr.mxu0 0.0
    %227 = vmatpush1.msra.mxu0 0.0
    %228 = vmatprep.subr.mxu0 0.0
    %229 = vmatpush1.msra.mxu0 0.0
    %230 = vmatprep.subr.mxu0 0.0
    %231 = vmatpush1.msra.mxu0 0.0
    %232 = vmatprep.subr.mxu0 0.0
    %233 = vmatpush1.msra.mxu0 0.0
    %234 = vmatprep.subr.mxu0 0.0
    %235 = vmatpush1.msra.mxu0 0.0
    %236 = vmatprep.subr.mxu0 0.0
    %237 = vmatpush1.msra.mxu0 0.0
    %238 = vmatprep.subr.mxu0 0.0
    %239 = vmatpush1.msra.mxu0 0.0
    %240 = vmatprep.subr.mxu0 0.0
    %241 = vmatpush1.msra.mxu0 0.0
    %242 = vmatprep.subr.mxu0 0.0
    %243 = vmatpush1.msra.mxu0 0.0
    %244 = vmatprep.subr.mxu0 0.0
    %245 = vmatpush1.msra.mxu0 0.0
    %246 = vmatprep.subr.mxu0 0.0
    %247 = vmatpush1.msra.mxu0 0.0
    %248 = vmatprep.subr.mxu0 0.0
    %249 = vmatpush1.msra.mxu0 0.0
    %250 = vmatprep.mubr.f32.mxu0 0.0
    %251 = vmatmul.mubr.f32.gmra.mrb[0].mxu0 %v59
    %v252 = vpop.f32.mrb[0].mxu0
    %v253 = vadd.f32 0.0, %v252
    %v254 = vpop.f32.mrb[0].mxu0
    %255 = vmatprep.mubr.f32.mxu0 0.0
    %256 = vmatmul.mubr.f32.gmra.mrb[0].mxu0 %v60
    %v257 = vpop.f32.mrb[0].mxu0
    %v258 = vadd.f32 0.0, %v257
    %v259 = vpop.f32.mrb[0].mxu0
    %260 = vdwg.mxu0
    %v261 = vlaneseq
    %v262 = vshrl.u32 %v261, 7
    %v263 = vlaneseq
    %v264 = vand.u32 %v263, 127
    %vm265 = vcmp.le.s32.totalorder %v264, %v262
    %vm266 = vcmask 261120
    %v268 = vsel %vm266, %v176, 0
    %v271 = vsel %vm266, %v178, 0
    %273 = vmatprep.subr.mxu0 0.0
    %274 = vmatpush1.xpose.msra.mxu0 %v271
    %275 = vmatprep.subr.mxu0 0.0
    %276 = vmatpush1.xpose.msra.mxu0 0.0
    %277 = vmatprep.subr.mxu0 0.0
    %278 = vmatpush1.xpose.msra.mxu0 0.0
    %279 = vmatprep.subr.mxu0 0.0
    %280 = vmatpush1.xpose.msra.mxu0 0.0
    %281 = vmatprep.subr.mxu0 0.0
    %282 = vmatpush1.xpose.msra.mxu0 0.0
    %283 = vmatprep.subr.mxu0 0.0
    %284 = vmatpush1.xpose.msra.mxu0 0.0
    %285 = vmatprep.subr.mxu0 0.0
    %286 = vmatpush1.xpose.msra.mxu0 0.0
    %287 = vmatprep.subr.mxu0 0.0
    %288 = vmatpush1.xpose.msra.mxu0 0.0
    %289 = vmatprep.subr.mxu0 0.0
    %290 = vmatpush1.xpose.msra.mxu0 0.0
    %291 = vmatprep.subr.mxu0 0.0
    %292 = vmatpush1.xpose.msra.mxu0 0.0
    %293 = vmatprep.subr.mxu0 0.0
    %294 = vmatpush1.xpose.msra.mxu0 0.0
    %295 = vmatprep.subr.mxu0 0.0
    %296 = vmatpush1.xpose.msra.mxu0 0.0
    %297 = vmatprep.subr.mxu0 0.0
    %298 = vmatpush1.xpose.msra.mxu0 0.0
    %299 = vmatprep.subr.mxu0 0.0
    %300 = vmatpush1.xpose.msra.mxu0 0.0
    %301 = vmatprep.subr.mxu0 0.0
    %302 = vmatpush1.xpose.msra.mxu0 0.0
    %303 = vmatprep.subr.mxu0 0.0
    %304 = vmatpush1.xpose.msra.mxu0 0.0
    %305 = vmatprep.subr.mxu0 0.0
    %306 = vmatpush1.xpose.msra.mxu0 0.0
    %307 = vmatprep.subr.mxu0 0.0
    %308 = vmatpush1.xpose.msra.mxu0 0.0
    %309 = vmatprep.subr.mxu0 0.0
    %310 = vmatpush1.xpose.msra.mxu0 0.0
    %311 = vmatprep.subr.mxu0 0.0
    %312 = vmatpush1.xpose.msra.mxu0 0.0
    %313 = vmatprep.subr.mxu0 0.0
    %314 = vmatpush1.xpose.msra.mxu0 0.0
    %315 = vmatprep.subr.mxu0 0.0
    %316 = vmatpush1.xpose.msra.mxu0 0.0
    %317 = vmatprep.subr.mxu0 0.0
    %318 = vmatpush1.xpose.msra.mxu0 0.0
    %319 = vmatprep.subr.mxu0 0.0
    %320 = vmatpush1.xpose.msra.mxu0 0.0
    %321 = vmatprep.subr.mxu0 0.0
    %322 = vmatpush1.xpose.msra.mxu0 0.0
    %323 = vmatprep.subr.mxu0 0.0
    %324 = vmatpush1.xpose.msra.mxu0 0.0
    %325 = vmatprep.subr.mxu0 0.0
    %326 = vmatpush1.xpose.msra.mxu0 0.0
    %327 = vmatprep.subr.mxu0 0.0
    %328 = vmatpush1.xpose.msra.mxu0 0.0
    %329 = vmatprep.subr.mxu0 0.0
    %330 = vmatpush1.xpose.msra.mxu0 0.0
    %331 = vmatprep.subr.mxu0 0.0
    %332 = vmatpush1.xpose.msra.mxu0 0.0
    %333 = vmatprep.subr.mxu0 0.0
    %334 = vmatpush1.xpose.msra.mxu0 0.0
    %335 = vmatprep.subr.mxu0 0.0
    %336 = vmatpush1.xpose.msra.mxu0 0.0
    %337 = vmatprep.mubr.f32.mxu0 0.0
    %338 = vmatmul.mubr.f32.gmra.mrb[0].mxu0 %v268
    %v339 = vpop.f32.mrb[0].mxu0
    %v340 = vadd.f32 0.0, %v339
    %v341 = vpop.f32.mrb[0].mxu0
    %342 = vdwg.mxu0
    %v343 = vsel %vm265, %v340, -1e+30
    %vm344 = vcmask 64512
    %v345 = vsel %vm344, %v343, -inf
    %346 = vmax.xlane.f32.xlu0 %v345
    %v347 = vpop.xlane.xlu0 %346
    %v348 = vsub.f32 %v343, %v347
    %v349 = vmul.f32 %v348, 1.442695
    %v350 = vpow.pop %v349
    %v351 = vsel %vm344, %v350, 0.0
    %352 = vadd.xlane.f32.xlu0 %v351
    %v353 = vpop.xlane.xlu0 %352
    %v354 = vrcp.pop %v353
    %v355 = vmul.f32 %v350, %v354
    %v357 = vsel %vm344, %v355, 0
    %359 = vmatprep.subr.mxu0 0.0
    %360 = vmatpush1.msra.mxu0 %v253
    %361 = vmatprep.subr.mxu0 0.0
    %362 = vmatpush1.msra.mxu0 0.0
    %363 = vmatprep.subr.mxu0 0.0
    %364 = vmatpush1.msra.mxu0 0.0
    %365 = vmatprep.subr.mxu0 0.0
    %366 = vmatpush1.msra.mxu0 0.0
    %367 = vmatprep.subr.mxu0 0.0
    %368 = vmatpush1.msra.mxu0 0.0
    %369 = vmatprep.subr.mxu0 0.0
    %370 = vmatpush1.msra.mxu0 0.0
    %371 = vmatprep.subr.mxu0 0.0
    %372 = vmatpush1.msra.mxu0 0.0
    %373 = vmatprep.subr.mxu0 0.0
    %374 = vmatpush1.msra.mxu0 0.0
    %375 = vmatprep.subr.mxu0 0.0
    %376 = vmatpush1.msra.mxu0 0.0
    %377 = vmatprep.subr.mxu0 0.0
    %378 = vmatpush1.msra.mxu0 0.0
    %379 = vmatprep.subr.mxu0 0.0
    %380 = vmatpush1.msra.mxu0 0.0
    %381 = vmatprep.subr.mxu0 0.0
    %382 = vmatpush1.msra.mxu0 0.0
    %383 = vmatprep.subr.mxu0 0.0
    %384 = vmatpush1.msra.mxu0 0.0
    %385 = vmatprep.subr.mxu0 0.0
    %386 = vmatpush1.msra.mxu0 0.0
    %387 = vmatprep.subr.mxu0 0.0
    %388 = vmatpush1.msra.mxu0 0.0
    %389 = vmatprep.subr.mxu0 0.0
    %390 = vmatpush1.msra.mxu0 0.0
    %391 = vmatprep.subr.mxu0 0.0
    %392 = vmatpush1.msra.mxu0 0.0
    %393 = vmatprep.subr.mxu0 0.0
    %394 = vmatpush1.msra.mxu0 0.0
    %395 = vmatprep.subr.mxu0 0.0
    %396 = vmatpush1.msra.mxu0 0.0
    %397 = vmatprep.subr.mxu0 0.0
    %398 = vmatpush1.msra.mxu0 0.0
    %399 = vmatprep.subr.mxu0 0.0
    %400 = vmatpush1.msra.mxu0 0.0
    %401 = vmatprep.subr.mxu0 0.0
    %402 = vmatpush1.msra.mxu0 0.0
    %403 = vmatprep.subr.mxu0 0.0
    %404 = vmatpush1.msra.mxu0 0.0
    %405 = vmatprep.subr.mxu0 0.0
    %406 = vmatpush1.msra.mxu0 0.0
    %407 = vmatprep.subr.mxu0 0.0
    %408 = vmatpush1.msra.mxu0 0.0
    %409 = vmatprep.subr.mxu0 0.0
    %410 = vmatpush1.msra.mxu0 0.0
    %411 = vmatprep.subr.mxu0 0.0
    %412 = vmatpush1.msra.mxu0 0.0
    %413 = vmatprep.subr.mxu0 0.0
    %414 = vmatpush1.msra.mxu0 0.0
    %415 = vmatprep.subr.mxu0 0.0
    %416 = vmatpush1.msra.mxu0 0.0
    %417 = vmatprep.subr.mxu0 0.0
    %418 = vmatpush1.msra.mxu0 0.0
    %419 = vmatprep.subr.mxu0 0.0
    %420 = vmatpush1.msra.mxu0 0.0
    %421 = vmatprep.subr.mxu0 0.0
    %422 = vmatpush1.msra.mxu0 0.0
    %423 = vmatprep.mubr.f32.mxu0 0.0
    %424 = vmatmul.mubr.f32.gmra.mrb[0].mxu0 %v357
    %v425 = vpop.f32.mrb[0].mxu0
    %v426 = vadd.f32 0.0, %v425
    %v427 = vpop.f32.mrb[0].mxu0
    %428 = vdwg.mxu0
    %429 = vst.msk [vmem:[#allocation2] sm:$0xff] %vm266, %v426
    %430 = vrot.lane.b32.xlu0 %v176, 96
    %v431 = vpop.permute.xlu0 %430
    %432 = vrot.lane.b32.xlu0 %v178, 96
    %v433 = vpop.permute.xlu0 %432
    %v434 = vsel %vm266, %v431, 0
    %v436 = vsel %vm266, %v433, 0
    %438 = vmatprep.subr.mxu0 0.0
    %439 = vmatpush1.xpose.msra.mxu0 %v436
    %440 = vmatprep.subr.mxu0 0.0
    %441 = vmatpush1.xpose.msra.mxu0 0.0
    %442 = vmatprep.subr.mxu0 0.0
    %443 = vmatpush1.xpose.msra.mxu0 0.0
    %444 = vmatprep.subr.mxu0 0.0
    %445 = vmatpush1.xpose.msra.mxu0 0.0
    %446 = vmatprep.subr.mxu0 0.0
    %447 = vmatpush1.xpose.msra.mxu0 0.0
    %448 = vmatprep.subr.mxu0 0.0
    %449 = vmatpush1.xpose.msra.mxu0 0.0
    %450 = vmatprep.subr.mxu0 0.0
    %451 = vmatpush1.xpose.msra.mxu0 0.0
    %452 = vmatprep.subr.mxu0 0.0
    %453 = vmatpush1.xpose.msra.mxu0 0.0
    %454 = vmatprep.subr.mxu0 0.0
    %455 = vmatpush1.xpose.msra.mxu0 0.0
    %456 = vmatprep.subr.mxu0 0.0
    %457 = vmatpush1.xpose.msra.mxu0 0.0
    %458 = vmatprep.subr.mxu0 0.0
    %459 = vmatpush1.xpose.msra.mxu0 0.0
    %460 = vmatprep.subr.mxu0 0.0
    %461 = vmatpush1.xpose.msra.mxu0 0.0
    %462 = vmatprep.subr.mxu0 0.0
    %463 = vmatpush1.xpose.msra.mxu0 0.0
    %464 = vmatprep.subr.mxu0 0.0
    %465 = vmatpush1.xpose.msra.mxu0 0.0
    %466 = vmatprep.subr.mxu0 0.0
    %467 = vmatpush1.xpose.msra.mxu0 0.0
    %468 = vmatprep.subr.mxu0 0.0
    %469 = vmatpush1.xpose.msra.mxu0 0.0
    %470 = vmatprep.subr.mxu0 0.0
    %471 = vmatpush1.xpose.msra.mxu0 0.0
    %472 = vmatprep.subr.mxu0 0.0
    %473 = vmatpush1.xpose.msra.mxu0 0.0
    %474 = vmatprep.subr.mxu0 0.0
    %475 = vmatpush1.xpose.msra.mxu0 0.0
    %476 = vmatprep.subr.mxu0 0.0
    %477 = vmatpush1.xpose.msra.mxu0 0.0
    %478 = vmatprep.subr.mxu0 0.0
    %479 = vmatpush1.xpose.msra.mxu0 0.0
    %480 = vmatprep.subr.mxu0 0.0
    %481 = vmatpush1.xpose.msra.mxu0 0.0
    %482 = vmatprep.subr.mxu0 0.0
    %483 = vmatpush1.xpose.msra.mxu0 0.0
    %484 = vmatprep.subr.mxu0 0.0
    %485 = vmatpush1.xpose.msra.mxu0 0.0
    %486 = vmatprep.subr.mxu0 0.0
    %487 = vmatpush1.xpose.msra.mxu0 0.0
    %488 = vmatprep.subr.mxu0 0.0
    %489 = vmatpush1.xpose.msra.mxu0 0.0
    %490 = vmatprep.subr.mxu0 0.0
    %491 = vmatpush1.xpose.msra.mxu0 0.0
    %492 = vmatprep.subr.mxu0 0.0
    %493 = vmatpush1.xpose.msra.mxu0 0.0
    %494 = vmatprep.subr.mxu0 0.0
    %495 = vmatpush1.xpose.msra.mxu0 0.0
    %496 = vmatprep.subr.mxu0 0.0
    %497 = vmatpush1.xpose.msra.mxu0 0.0
    %498 = vmatprep.subr.mxu0 0.0
    %499 = vmatpush1.xpose.msra.mxu0 0.0
    %500 = vmatprep.subr.mxu0 0.0
    %501 = vmatpush1.xpose.msra.mxu0 0.0
    %502 = vmatprep.mubr.f32.mxu0 0.0
    %503 = vmatmul.mubr.f32.gmra.mrb[0].mxu0 %v434
    %v504 = vpop.f32.mrb[0].mxu0
    %v505 = vadd.f32 0.0, %v504
    %v506 = vpop.f32.mrb[0].mxu0
    %507 = vdwg.mxu0
    %v508 = vsel %vm265, %v505, -1e+30
    %v509 = vsel %vm344, %v508, -inf
    %510 = vmax.xlane.f32.xlu0 %v509
    %v511 = vpop.xlane.xlu0 %510
    %v512 = vsub.f32 %v508, %v511
    %v513 = vmul.f32 %v512, 1.442695
    %v514 = vpow.pop %v513
    %v515 = vsel %vm344, %v514, 0.0
    %516 = vadd.xlane.f32.xlu0 %v515
    %v517 = vpop.xlane.xlu0 %516
    %v518 = vrcp.pop %v517
    %v519 = vmul.f32 %v514, %v518
    %521 = vrot.lane.b32.xlu0 %v253, 96
    %v522 = vpop.permute.xlu0 %521
    %v525 = vsel %vm344, %v519, 0
    %527 = vmatprep.subr.mxu0 0.0
    %528 = vmatpush1.msra.mxu0 %v522
    %529 = vmatprep.subr.mxu0 0.0
    %530 = vmatpush1.msra.mxu0 0.0
    %531 = vmatprep.subr.mxu0 0.0
    %532 = vmatpush1.msra.mxu0 0.0
    %533 = vmatprep.subr.mxu0 0.0
    %534 = vmatpush1.msra.mxu0 0.0
    %535 = vmatprep.subr.mxu0 0.0
    %536 = vmatpush1.msra.mxu0 0.0
    %537 = vmatprep.subr.mxu0 0.0
    %538 = vmatpush1.msra.mxu0 0.0
    %539 = vmatprep.subr.mxu0 0.0
    %540 = vmatpush1.msra.mxu0 0.0
    %541 = vmatprep.subr.mxu0 0.0
    %542 = vmatpush1.msra.mxu0 0.0
    %543 = vmatprep.subr.mxu0 0.0
    %544 = vmatpush1.msra.mxu0 0.0
    %545 = vmatprep.subr.mxu0 0.0
    %546 = vmatpush1.msra.mxu0 0.0
    %547 = vmatprep.subr.mxu0 0.0
    %548 = vmatpush1.msra.mxu0 0.0
    %549 = vmatprep.subr.mxu0 0.0
    %550 = vmatpush1.msra.mxu0 0.0
    %551 = vmatprep.subr.mxu0 0.0
    %552 = vmatpush1.msra.mxu0 0.0
    %553 = vmatprep.subr.mxu0 0.0
    %554 = vmatpush1.msra.mxu0 0.0
    %555 = vmatprep.subr.mxu0 0.0
    %556 = vmatpush1.msra.mxu0 0.0
    %557 = vmatprep.subr.mxu0 0.0
    %558 = vmatpush1.msra.mxu0 0.0
    %559 = vmatprep.subr.mxu0 0.0
    %560 = vmatpush1.msra.mxu0 0.0
    %561 = vmatprep.subr.mxu0 0.0
    %562 = vmatpush1.msra.mxu0 0.0
    %563 = vmatprep.subr.mxu0 0.0
    %564 = vmatpush1.msra.mxu0 0.0
    %565 = vmatprep.subr.mxu0 0.0
    %566 = vmatpush1.msra.mxu0 0.0
    %567 = vmatprep.subr.mxu0 0.0
    %568 = vmatpush1.msra.mxu0 0.0
    %569 = vmatprep.subr.mxu0 0.0
    %570 = vmatpush1.msra.mxu0 0.0
    %571 = vmatprep.subr.mxu0 0.0
    %572 = vmatpush1.msra.mxu0 0.0
    %573 = vmatprep.subr.mxu0 0.0
    %574 = vmatpush1.msra.mxu0 0.0
    %575 = vmatprep.subr.mxu0 0.0
    %576 = vmatpush1.msra.mxu0 0.0
    %577 = vmatprep.subr.mxu0 0.0
    %578 = vmatpush1.msra.mxu0 0.0
    %579 = vmatprep.subr.mxu0 0.0
    %580 = vmatpush1.msra.mxu0 0.0
    %581 = vmatprep.subr.mxu0 0.0
    %582 = vmatpush1.msra.mxu0 0.0
    %583 = vmatprep.subr.mxu0 0.0
    %584 = vmatpush1.msra.mxu0 0.0
    %585 = vmatprep.subr.mxu0 0.0
    %586 = vmatpush1.msra.mxu0 0.0
    %587 = vmatprep.subr.mxu0 0.0
    %588 = vmatpush1.msra.mxu0 0.0
    %589 = vmatprep.subr.mxu0 0.0
    %590 = vmatpush1.msra.mxu0 0.0
    %591 = vmatprep.mubr.f32.mxu0 0.0
    %592 = vmatmul.mubr.f32.gmra.mrb[0].mxu0 %v525
    %v593 = vpop.f32.mrb[0].mxu0
    %v594 = vadd.f32 0.0, %v593
    %v595 = vpop.f32.mrb[0].mxu0
    %596 = vdwg.mxu0
    %598 = vrot.lane.b32.xlu0 %v594, 32
    %v599 = vpop.permute.xlu0 %598
    %vm601 = vcmask 523520
    %602 = vst.msk [vmem:[#allocation2] sm:$0xff] %vm601, %v599
    %603 = vrot.lane.b32.xlu0 %v176, 64
    %v604 = vpop.permute.xlu0 %603
    %605 = vrot.lane.b32.xlu0 %v178, 64
    %v606 = vpop.permute.xlu0 %605
    %v607 = vsel %vm266, %v604, 0
    %v609 = vsel %vm266, %v606, 0
    %611 = vmatprep.subr.mxu0 0.0
    %612 = vmatpush1.xpose.msra.mxu0 %v609
    %613 = vmatprep.subr.mxu0 0.0
    %614 = vmatpush1.xpose.msra.mxu0 0.0
    %615 = vmatprep.subr.mxu0 0.0
    %616 = vmatpush1.xpose.msra.mxu0 0.0
    %617 = vmatprep.subr.mxu0 0.0
    %618 = vmatpush1.xpose.msra.mxu0 0.0
    %619 = vmatprep.subr.mxu0 0.0
    %620 = vmatpush1.xpose.msra.mxu0 0.0
    %621 = vmatprep.subr.mxu0 0.0
    %622 = vmatpush1.xpose.msra.mxu0 0.0
    %623 = vmatprep.subr.mxu0 0.0
    %624 = vmatpush1.xpose.msra.mxu0 0.0
    %625 = vmatprep.subr.mxu0 0.0
    %626 = vmatpush1.xpose.msra.mxu0 0.0
    %627 = vmatprep.subr.mxu0 0.0
    %628 = vmatpush1.xpose.msra.mxu0 0.0
    %629 = vmatprep.subr.mxu0 0.0
    %630 = vmatpush1.xpose.msra.mxu0 0.0
    %631 = vmatprep.subr.mxu0 0.0
    %632 = vmatpush1.xpose.msra.mxu0 0.0
    %633 = vmatprep.subr.mxu0 0.0
    %634 = vmatpush1.xpose.msra.mxu0 0.0
    %635 = vmatprep.subr.mxu0 0.0
    %636 = vmatpush1.xpose.msra.mxu0 0.0
    %637 = vmatprep.subr.mxu0 0.0
    %638 = vmatpush1.xpose.msra.mxu0 0.0
    %639 = vmatprep.subr.mxu0 0.0
    %640 = vmatpush1.xpose.msra.mxu0 0.0
    %641 = vmatprep.subr.mxu0 0.0
    %642 = vmatpush1.xpose.msra.mxu0 0.0
    %643 = vmatprep.subr.mxu0 0.0
    %644 = vmatpush1.xpose.msra.mxu0 0.0
    %645 = vmatprep.subr.mxu0 0.0
    %646 = vmatpush1.xpose.msra.mxu0 0.0
    %647 = vmatprep.subr.mxu0 0.0
    %648 = vmatpush1.xpose.msra.mxu0 0.0
    %649 = vmatprep.subr.mxu0 0.0
    %650 = vmatpush1.xpose.msra.mxu0 0.0
    %651 = vmatprep.subr.mxu0 0.0
    %652 = vmatpush1.xpose.msra.mxu0 0.0
    %653 = vmatprep.subr.mxu0 0.0
    %654 = vmatpush1.xpose.msra.mxu0 0.0
    %655 = vmatprep.subr.mxu0 0.0
    %656 = vmatpush1.xpose.msra.mxu0 0.0
    %657 = vmatprep.subr.mxu0 0.0
    %658 = vmatpush1.xpose.msra.mxu0 0.0
    %659 = vmatprep.subr.mxu0 0.0
    %660 = vmatpush1.xpose.msra.mxu0 0.0
    %661 = vmatprep.subr.mxu0 0.0
    %662 = vmatpush1.xpose.msra.mxu0 0.0
    %663 = vmatprep.subr.mxu0 0.0
    %664 = vmatpush1.xpose.msra.mxu0 0.0
    %665 = vmatprep.subr.mxu0 0.0
    %666 = vmatpush1.xpose.msra.mxu0 0.0
    %667 = vmatprep.subr.mxu0 0.0
    %668 = vmatpush1.xpose.msra.mxu0 0.0
    %669 = vmatprep.subr.mxu0 0.0
    %670 = vmatpush1.xpose.msra.mxu0 0.0
    %671 = vmatprep.subr.mxu0 0.0
    %672 = vmatpush1.xpose.msra.mxu0 0.0
    %673 = vmatprep.subr.mxu0 0.0
    %674 = vmatpush1.xpose.msra.mxu0 0.0
    %675 = vmatprep.mubr.f32.mxu0 0.0
    %676 = vmatmul.mubr.f32.gmra.mrb[0].mxu0 %v607
    %v677 = vpop.f32.mrb[0].mxu0
    %v678 = vadd.f32 0.0, %v677
    %v679 = vpop.f32.mrb[0].mxu0
    %680 = vdwg.mxu0
    %v681 = vsel %vm265, %v678, -1e+30
    %v682 = vsel %vm344, %v681, -inf
    %683 = vmax.xlane.f32.xlu0 %v682
    %v684 = vpop.xlane.xlu0 %683
    %v685 = vsub.f32 %v681, %v684
    %v686 = vmul.f32 %v685, 1.442695
    %v687 = vpow.pop %v686
    %v688 = vsel %vm344, %v687, 0.0
    %689 = vadd.xlane.f32.xlu0 %v688
    %v690 = vpop.xlane.xlu0 %689
    %v691 = vrcp.pop %v690
    %v692 = vmul.f32 %v687, %v691
    %693 = vrot.lane.b32.xlu0 %v253, 64
    %v694 = vpop.permute.xlu0 %693
    %v697 = vsel %vm344, %v692, 0
    %699 = vmatprep.subr.mxu0 0.0
    %700 = vmatpush1.msra.mxu0 %v694
    %701 = vmatprep.subr.mxu0 0.0
    %702 = vmatpush1.msra.mxu0 0.0
    %703 = vmatprep.subr.mxu0 0.0
    %704 = vmatpush1.msra.mxu0 0.0
    %705 = vmatprep.subr.mxu0 0.0
    %706 = vmatpush1.msra.mxu0 0.0
    %707 = vmatprep.subr.mxu0 0.0
    %708 = vmatpush1.msra.mxu0 0.0
    %709 = vmatprep.subr.mxu0 0.0
    %710 = vmatpush1.msra.mxu0 0.0
    %711 = vmatprep.subr.mxu0 0.0
    %712 = vmatpush1.msra.mxu0 0.0
    %713 = vmatprep.subr.mxu0 0.0
    %714 = vmatpush1.msra.mxu0 0.0
    %715 = vmatprep.subr.mxu0 0.0
    %716 = vmatpush1.msra.mxu0 0.0
    %717 = vmatprep.subr.mxu0 0.0
    %718 = vmatpush1.msra.mxu0 0.0
    %719 = vmatprep.subr.mxu0 0.0
    %720 = vmatpush1.msra.mxu0 0.0
    %721 = vmatprep.subr.mxu0 0.0
    %722 = vmatpush1.msra.mxu0 0.0
    %723 = vmatprep.subr.mxu0 0.0
    %724 = vmatpush1.msra.mxu0 0.0
    %725 = vmatprep.subr.mxu0 0.0
    %726 = vmatpush1.msra.mxu0 0.0
    %727 = vmatprep.subr.mxu0 0.0
    %728 = vmatpush1.msra.mxu0 0.0
    %729 = vmatprep.subr.mxu0 0.0
    %730 = vmatpush1.msra.mxu0 0.0
    %731 = vmatprep.subr.mxu0 0.0
    %732 = vmatpush1.msra.mxu0 0.0
    %733 = vmatprep.subr.mxu0 0.0
    %734 = vmatpush1.msra.mxu0 0.0
    %735 = vmatprep.subr.mxu0 0.0
    %736 = vmatpush1.msra.mxu0 0.0
    %737 = vmatprep.subr.mxu0 0.0
    %738 = vmatpush1.msra.mxu0 0.0
    %739 = vmatprep.subr.mxu0 0.0
    %740 = vmatpush1.msra.mxu0 0.0
    %741 = vmatprep.subr.mxu0 0.0
    %742 = vmatpush1.msra.mxu0 0.0
    %743 = vmatprep.subr.mxu0 0.0
    %744 = vmatpush1.msra.mxu0 0.0
    %745 = vmatprep.subr.mxu0 0.0
    %746 = vmatpush1.msra.mxu0 0.0
    %747 = vmatprep.subr.mxu0 0.0
    %748 = vmatpush1.msra.mxu0 0.0
    %749 = vmatprep.subr.mxu0 0.0
    %750 = vmatpush1.msra.mxu0 0.0
    %751 = vmatprep.subr.mxu0 0.0
    %752 = vmatpush1.msra.mxu0 0.0
    %753 = vmatprep.subr.mxu0 0.0
    %754 = vmatpush1.msra.mxu0 0.0
    %755 = vmatprep.subr.mxu0 0.0
    %756 = vmatpush1.msra.mxu0 0.0
    %757 = vmatprep.subr.mxu0 0.0
    %758 = vmatpush1.msra.mxu0 0.0
    %759 = vmatprep.subr.mxu0 0.0
    %760 = vmatpush1.msra.mxu0 0.0
    %761 = vmatprep.subr.mxu0 0.0
    %762 = vmatpush1.msra.mxu0 0.0
    %763 = vmatprep.mubr.f32.mxu0 0.0
    %764 = vmatmul.mubr.f32.gmra.mrb[0].mxu0 %v697
    %v765 = vpop.f32.mrb[0].mxu0
    %v766 = vadd.f32 0.0, %v765
    %v767 = vpop.f32.mrb[0].mxu0
    %768 = vdwg.mxu0
    %770 = vrot.lane.b32.xlu0 %v766, 64
    %v771 = vpop.permute.xlu0 %770
    %vm773 = vcmask 785920
    %774 = vst.msk [vmem:[#allocation2] sm:$0xff] %vm773, %v771
    %775 = vrot.lane.b32.xlu0 %v176, 32
    %v776 = vpop.permute.xlu0 %775
    %777 = vrot.lane.b32.xlu0 %v178, 32
    %v778 = vpop.permute.xlu0 %777
    %v779 = vsel %vm266, %v776, 0
    %v781 = vsel %vm266, %v778, 0
    %783 = vmatprep.subr.mxu0 0.0
    %784 = vmatpush1.xpose.msra.mxu0 %v781
    %785 = vmatprep.subr.mxu0 0.0
    %786 = vmatpush1.xpose.msra.mxu0 0.0
    %787 = vmatprep.subr.mxu0 0.0
    %788 = vmatpush1.xpose.msra.mxu0 0.0
    %789 = vmatprep.subr.mxu0 0.0
    %790 = vmatpush1.xpose.msra.mxu0 0.0
    %791 = vmatprep.subr.mxu0 0.0
    %792 = vmatpush1.xpose.msra.mxu0 0.0
    %793 = vmatprep.subr.mxu0 0.0
    %794 = vmatpush1.xpose.msra.mxu0 0.0
    %795 = vmatprep.subr.mxu0 0.0
    %796 = vmatpush1.xpose.msra.mxu0 0.0
    %797 = vmatprep.subr.mxu0 0.0
    %798 = vmatpush1.xpose.msra.mxu0 0.0
    %799 = vmatprep.subr.mxu0 0.0
    %800 = vmatpush1.xpose.msra.mxu0 0.0
    %801 = vmatprep.subr.mxu0 0.0
    %802 = vmatpush1.xpose.msra.mxu0 0.0
    %803 = vmatprep.subr.mxu0 0.0
    %804 = vmatpush1.xpose.msra.mxu0 0.0
    %805 = vmatprep.subr.mxu0 0.0
    %806 = vmatpush1.xpose.msra.mxu0 0.0
    %807 = vmatprep.subr.mxu0 0.0
    %808 = vmatpush1.xpose.msra.mxu0 0.0
    %809 = vmatprep.subr.mxu0 0.0
    %810 = vmatpush1.xpose.msra.mxu0 0.0
    %811 = vmatprep.subr.mxu0 0.0
    %812 = vmatpush1.xpose.msra.mxu0 0.0
    %813 = vmatprep.subr.mxu0 0.0
    %814 = vmatpush1.xpose.msra.mxu0 0.0
    %815 = vmatprep.subr.mxu0 0.0
    %816 = vmatpush1.xpose.msra.mxu0 0.0
    %817 = vmatprep.subr.mxu0 0.0
    %818 = vmatpush1.xpose.msra.mxu0 0.0
    %819 = vmatprep.subr.mxu0 0.0
    %820 = vmatpush1.xpose.msra.mxu0 0.0
    %821 = vmatprep.subr.mxu0 0.0
    %822 = vmatpush1.xpose.msra.mxu0 0.0
    %823 = vmatprep.subr.mxu0 0.0
    %824 = vmatpush1.xpose.msra.mxu0 0.0
    %825 = vmatprep.subr.mxu0 0.0
    %826 = vmatpush1.xpose.msra.mxu0 0.0
    %827 = vmatprep.subr.mxu0 0.0
    %828 = vmatpush1.xpose.msra.mxu0 0.0
    %829 = vmatprep.subr.mxu0 0.0
    %830 = vmatpush1.xpose.msra.mxu0 0.0
    %831 = vmatprep.subr.mxu0 0.0
    %832 = vmatpush1.xpose.msra.mxu0 0.0
    %833 = vmatprep.subr.mxu0 0.0
    %834 = vmatpush1.xpose.msra.mxu0 0.0
    %835 = vmatprep.subr.mxu0 0.0
    %836 = vmatpush1.xpose.msra.mxu0 0.0
    %837 = vmatprep.subr.mxu0 0.0
    %838 = vmatpush1.xpose.msra.mxu0 0.0
    %839 = vmatprep.subr.mxu0 0.0
    %840 = vmatpush1.xpose.msra.mxu0 0.0
    %841 = vmatprep.subr.mxu0 0.0
    %842 = vmatpush1.xpose.msra.mxu0 0.0
    %843 = vmatprep.subr.mxu0 0.0
    %844 = vmatpush1.xpose.msra.mxu0 0.0
    %845 = vmatprep.subr.mxu0 0.0
    %846 = vmatpush1.xpose.msra.mxu0 0.0
    %847 = vmatprep.mubr.f32.mxu0 0.0
    %848 = vmatmul.mubr.f32.gmra.mrb[0].mxu0 %v779
    %v849 = vpop.f32.mrb[0].mxu0
    %v850 = vadd.f32 0.0, %v849
    %v851 = vpop.f32.mrb[0].mxu0
    %852 = vdwg.mxu0
    %v853 = vsel %vm265, %v850, -1e+30
    %v854 = vsel %vm344, %v853, -inf
    %855 = vmax.xlane.f32.xlu0 %v854
    %v856 = vpop.xlane.xlu0 %855
    %v857 = vsub.f32 %v853, %v856
    %v858 = vmul.f32 %v857, 1.442695
    %v859 = vpow.pop %v858
    %v860 = vsel %vm344, %v859, 0.0
    %861 = vadd.xlane.f32.xlu0 %v860
    %v862 = vpop.xlane.xlu0 %861
    %v863 = vrcp.pop %v862
    %v864 = vmul.f32 %v859, %v863
    %865 = vrot.lane.b32.xlu0 %v253, 32
    %v866 = vpop.permute.xlu0 %865
    %v869 = vsel %vm344, %v864, 0
    %871 = vmatprep.subr.mxu0 0.0
    %872 = vmatpush1.msra.mxu0 %v866
    %873 = vmatprep.subr.mxu0 0.0
    %874 = vmatpush1.msra.mxu0 0.0
    %875 = vmatprep.subr.mxu0 0.0
    %876 = vmatpush1.msra.mxu0 0.0
    %877 = vmatprep.subr.mxu0 0.0
    %878 = vmatpush1.msra.mxu0 0.0
    %879 = vmatprep.subr.mxu0 0.0
    %880 = vmatpush1.msra.mxu0 0.0
    %881 = vmatprep.subr.mxu0 0.0
    %882 = vmatpush1.msra.mxu0 0.0
    %883 = vmatprep.subr.mxu0 0.0
    %884 = vmatpush1.msra.mxu0 0.0
    %885 = vmatprep.subr.mxu0 0.0
    %886 = vmatpush1.msra.mxu0 0.0
    %887 = vmatprep.subr.mxu0 0.0
    %888 = vmatpush1.msra.mxu0 0.0
    %889 = vmatprep.subr.mxu0 0.0
    %890 = vmatpush1.msra.mxu0 0.0
    %891 = vmatprep.subr.mxu0 0.0
    %892 = vmatpush1.msra.mxu0 0.0
    %893 = vmatprep.subr.mxu0 0.0
    %894 = vmatpush1.msra.mxu0 0.0
    %895 = vmatprep.subr.mxu0 0.0
    %896 = vmatpush1.msra.mxu0 0.0
    %897 = vmatprep.subr.mxu0 0.0
    %898 = vmatpush1.msra.mxu0 0.0
    %899 = vmatprep.subr.mxu0 0.0
    %900 = vmatpush1.msra.mxu0 0.0
    %901 = vmatprep.subr.mxu0 0.0
    %902 = vmatpush1.msra.mxu0 0.0
    %903 = vmatprep.subr.mxu0 0.0
    %904 = vmatpush1.msra.mxu0 0.0
    %905 = vmatprep.subr.mxu0 0.0
    %906 = vmatpush1.msra.mxu0 0.0
    %907 = vmatprep.subr.mxu0 0.0
    %908 = vmatpush1.msra.mxu0 0.0
    %909 = vmatprep.subr.mxu0 0.0
    %910 = vmatpush1.msra.mxu0 0.0
    %911 = vmatprep.subr.mxu0 0.0
    %912 = vmatpush1.msra.mxu0 0.0
    %913 = vmatprep.subr.mxu0 0.0
    %914 = vmatpush1.msra.mxu0 0.0
    %915 = vmatprep.subr.mxu0 0.0
    %916 = vmatpush1.msra.mxu0 0.0
    %917 = vmatprep.subr.mxu0 0.0
    %918 = vmatpush1.msra.mxu0 0.0
    %919 = vmatprep.subr.mxu0 0.0
    %920 = vmatpush1.msra.mxu0 0.0
    %921 = vmatprep.subr.mxu0 0.0
    %922 = vmatpush1.msra.mxu0 0.0
    %923 = vmatprep.subr.mxu0 0.0
    %924 = vmatpush1.msra.mxu0 0.0
    %925 = vmatprep.subr.mxu0 0.0
    %926 = vmatpush1.msra.mxu0 0.0
    %927 = vmatprep.subr.mxu0 0.0
    %928 = vmatpush1.msra.mxu0 0.0
    %929 = vmatprep.subr.mxu0 0.0
    %930 = vmatpush1.msra.mxu0 0.0
    %931 = vmatprep.subr.mxu0 0.0
    %932 = vmatpush1.msra.mxu0 0.0
    %933 = vmatprep.subr.mxu0 0.0
    %934 = vmatpush1.msra.mxu0 0.0
    %935 = vmatprep.mubr.f32.mxu0 0.0
    %936 = vmatmul.mubr.f32.gmra.mrb[0].mxu0 %v869
    %v937 = vpop.f32.mrb[0].mxu0
    %v938 = vadd.f32 0.0, %v937
    %v939 = vpop.f32.mrb[0].mxu0
    %940 = vdwg.mxu0
    %942 = vrot.lane.b32.xlu0 %v938, 96
    %v943 = vpop.permute.xlu0 %942
    %vm945 = vcmask 1048320
    %946 = vst.msk [vmem:[#allocation2] sm:$0xff] %vm945, %v943
    %v948 = vsel %vm266, %v182, 0
    %v951 = vsel %vm266, %v184, 0
    %953 = vmatprep.subr.mxu0 0.0
    %954 = vmatpush1.xpose.msra.mxu0 %v951
    %955 = vmatprep.subr.mxu0 0.0
    %956 = vmatpush1.xpose.msra.mxu0 0.0
    %957 = vmatprep.subr.mxu0 0.0
    %958 = vmatpush1.xpose.msra.mxu0 0.0
    %959 = vmatprep.subr.mxu0 0.0
    %960 = vmatpush1.xpose.msra.mxu0 0.0
    %961 = vmatprep.subr.mxu0 0.0
    %962 = vmatpush1.xpose.msra.mxu0 0.0
    %963 = vmatprep.subr.mxu0 0.0
    %964 = vmatpush1.xpose.msra.mxu0 0.0
    %965 = vmatprep.subr.mxu0 0.0
    %966 = vmatpush1.xpose.msra.mxu0 0.0
    %967 = vmatprep.subr.mxu0 0.0
    %968 = vmatpush1.xpose.msra.mxu0 0.0
    %969 = vmatprep.subr.mxu0 0.0
    %970 = vmatpush1.xpose.msra.mxu0 0.0
    %971 = vmatprep.subr.mxu0 0.0
    %972 = vmatpush1.xpose.msra.mxu0 0.0
    %973 = vmatprep.subr.mxu0 0.0
    %974 = vmatpush1.xpose.msra.mxu0 0.0
    %975 = vmatprep.subr.mxu0 0.0
    %976 = vmatpush1.xpose.msra.mxu0 0.0
    %977 = vmatprep.subr.mxu0 0.0
    %978 = vmatpush1.xpose.msra.mxu0 0.0
    %979 = vmatprep.subr.mxu0 0.0
    %980 = vmatpush1.xpose.msra.mxu0 0.0
    %981 = vmatprep.subr.mxu0 0.0
    %982 = vmatpush1.xpose.msra.mxu0 0.0
    %983 = vmatprep.subr.mxu0 0.0
    %984 = vmatpush1.xpose.msra.mxu0 0.0
    %985 = vmatprep.subr.mxu0 0.0
    %986 = vmatpush1.xpose.msra.mxu0 0.0
    %987 = vmatprep.subr.mxu0 0.0
    %988 = vmatpush1.xpose.msra.mxu0 0.0
    %989 = vmatprep.subr.mxu0 0.0
    %990 = vmatpush1.xpose.msra.mxu0 0.0
    %991 = vmatprep.subr.mxu0 0.0
    %992 = vmatpush1.xpose.msra.mxu0 0.0
    %993 = vmatprep.subr.mxu0 0.0
    %994 = vmatpush1.xpose.msra.mxu0 0.0
    %995 = vmatprep.subr.mxu0 0.0
    %996 = vmatpush1.xpose.msra.mxu0 0.0
    %997 = vmatprep.subr.mxu0 0.0
    %998 = vmatpush1.xpose.msra.mxu0 0.0
    %999 = vmatprep.subr.mxu0 0.0
    %1000 = vmatpush1.xpose.msra.mxu0 0.0
    %1001 = vmatprep.subr.mxu0 0.0
    %1002 = vmatpush1.xpose.msra.mxu0 0.0
    %1003 = vmatprep.subr.mxu0 0.0
    %1004 = vmatpush1.xpose.msra.mxu0 0.0
    %1005 = vmatprep.subr.mxu0 0.0
    %1006 = vmatpush1.xpose.msra.mxu0 0.0
    %1007 = vmatprep.subr.mxu0 0.0
    %1008 = vmatpush1.xpose.msra.mxu0 0.0
    %1009 = vmatprep.subr.mxu0 0.0
    %1010 = vmatpush1.xpose.msra.mxu0 0.0
    %1011 = vmatprep.subr.mxu0 0.0
    %1012 = vmatpush1.xpose.msra.mxu0 0.0
    %1013 = vmatprep.subr.mxu0 0.0
    %1014 = vmatpush1.xpose.msra.mxu0 0.0
    %1015 = vmatprep.subr.mxu0 0.0
    %1016 = vmatpush1.xpose.msra.mxu0 0.0
    %1017 = vmatprep.mubr.f32.mxu0 0.0
    %1018 = vmatmul.mubr.f32.gmra.mrb[0].mxu0 %v948
    %v1019 = vpop.f32.mrb[0].mxu0
    %v1020 = vadd.f32 0.0, %v1019
    %v1021 = vpop.f32.mrb[0].mxu0
    %1022 = vdwg.mxu0
    %v1023 = vsel %vm265, %v1020, -1e+30
    %v1024 = vsel %vm344, %v1023, -inf
    %1025 = vmax.xlane.f32.xlu0 %v1024
    %v1026 = vpop.xlane.xlu0 %1025
    %v1027 = vsub.f32 %v1023, %v1026
    %v1028 = vmul.f32 %v1027, 1.442695
    %v1029 = vpow.pop %v1028
    %v1030 = vsel %vm344, %v1029, 0.0
    %1031 = vadd.xlane.f32.xlu0 %v1030
    %v1032 = vpop.xlane.xlu0 %1031
    %v1033 = vrcp.pop %v1032
    %v1034 = vmul.f32 %v1029, %v1033
    %v1036 = vsel %vm344, %v1034, 0
    %1038 = vmatprep.subr.mxu0 0.0
    %1039 = vmatpush1.msra.mxu0 %v258
    %1040 = vmatprep.subr.mxu0 0.0
    %1041 = vmatpush1.msra.mxu0 0.0
    %1042 = vmatprep.subr.mxu0 0.0
    %1043 = vmatpush1.msra.mxu0 0.0
    %1044 = vmatprep.subr.mxu0 0.0
    %1045 = vmatpush1.msra.mxu0 0.0
    %1046 = vmatprep.subr.mxu0 0.0
    %1047 = vmatpush1.msra.mxu0 0.0
    %1048 = vmatprep.subr.mxu0 0.0
    %1049 = vmatpush1.msra.mxu0 0.0
    %1050 = vmatprep.subr.mxu0 0.0
    %1051 = vmatpush1.msra.mxu0 0.0
    %1052 = vmatprep.subr.mxu0 0.0
    %1053 = vmatpush1.msra.mxu0 0.0
    %1054 = vmatprep.subr.mxu0 0.0
    %1055 = vmatpush1.msra.mxu0 0.0
    %1056 = vmatprep.subr.mxu0 0.0
    %1057 = vmatpush1.msra.mxu0 0.0
    %1058 = vmatprep.subr.mxu0 0.0
    %1059 = vmatpush1.msra.mxu0 0.0
    %1060 = vmatprep.subr.mxu0 0.0
    %1061 = vmatpush1.msra.mxu0 0.0
    %1062 = vmatprep.subr.mxu0 0.0
    %1063 = vmatpush1.msra.mxu0 0.0
    %1064 = vmatprep.subr.mxu0 0.0
    %1065 = vmatpush1.msra.mxu0 0.0
    %1066 = vmatprep.subr.mxu0 0.0
    %1067 = vmatpush1.msra.mxu0 0.0
    %1068 = vmatprep.subr.mxu0 0.0
    %1069 = vmatpush1.msra.mxu0 0.0
    %1070 = vmatprep.subr.mxu0 0.0
    %1071 = vmatpush1.msra.mxu0 0.0
    %1072 = vmatprep.subr.mxu0 0.0
    %1073 = vmatpush1.msra.mxu0 0.0
    %1074 = vmatprep.subr.mxu0 0.0
    %1075 = vmatpush1.msra.mxu0 0.0
    %1076 = vmatprep.subr.mxu0 0.0
    %1077 = vmatpush1.msra.mxu0 0.0
    %1078 = vmatprep.subr.mxu0 0.0
    %1079 = vmatpush1.msra.mxu0 0.0
    %1080 = vmatprep.subr.mxu0 0.0
    %1081 = vmatpush1.msra.mxu0 0.0
    %1082 = vmatprep.subr.mxu0 0.0
    %1083 = vmatpush1.msra.mxu0 0.0
    %1084 = vmatprep.subr.mxu0 0.0
    %1085 = vmatpush1.msra.mxu0 0.0
    %1086 = vmatprep.subr.mxu0 0.0
    %1087 = vmatpush1.msra.mxu0 0.0
    %1088 = vmatprep.subr.mxu0 0.0
    %1089 = vmatpush1.msra.mxu0 0.0
    %1090 = vmatprep.subr.mxu0 0.0
    %1091 = vmatpush1.msra.mxu0 0.0
    %1092 = vmatprep.subr.mxu0 0.0
    %1093 = vmatpush1.msra.mxu0 0.0
    %1094 = vmatprep.subr.mxu0 0.0
    %1095 = vmatpush1.msra.mxu0 0.0
    %1096 = vmatprep.subr.mxu0 0.0
    %1097 = vmatpush1.msra.mxu0 0.0
    %1098 = vmatprep.subr.mxu0 0.0
    %1099 = vmatpush1.msra.mxu0 0.0
    %1100 = vmatprep.subr.mxu0 0.0
    %1101 = vmatpush1.msra.mxu0 0.0
    %1102 = vmatprep.mubr.f32.mxu0 0.0
    %1103 = vmatmul.mubr.f32.gmra.mrb[0].mxu0 %v1036
    %v1104 = vpop.f32.mrb[0].mxu0
    %v1105 = vadd.f32 0.0, %v1104
    %v1106 = vpop.f32.mrb[0].mxu0
    %1107 = vdwg.mxu0
    %1108 = vst.msk [vmem:[#allocation2 + $0x8] sm:$0xff] %vm266, %v1105
    %1109 = vrot.lane.b32.xlu0 %v182, 96
    %v1110 = vpop.permute.xlu0 %1109
    %1111 = vrot.lane.b32.xlu0 %v184, 96
    %v1112 = vpop.permute.xlu0 %1111
    %v1113 = vsel %vm266, %v1110, 0
    %v1115 = vsel %vm266, %v1112, 0
    %1117 = vmatprep.subr.mxu0 0.0
    %1118 = vmatpush1.xpose.msra.mxu0 %v1115
    %1119 = vmatprep.subr.mxu0 0.0
    %1120 = vmatpush1.xpose.msra.mxu0 0.0
    %1121 = vmatprep.subr.mxu0 0.0
    %1122 = vmatpush1.xpose.msra.mxu0 0.0
    %1123 = vmatprep.subr.mxu0 0.0
    %1124 = vmatpush1.xpose.msra.mxu0 0.0
    %1125 = vmatprep.subr.mxu0 0.0
    %1126 = vmatpush1.xpose.msra.mxu0 0.0
    %1127 = vmatprep.subr.mxu0 0.0
    %1128 = vmatpush1.xpose.msra.mxu0 0.0
    %1129 = vmatprep.subr.mxu0 0.0
    %1130 = vmatpush1.xpose.msra.mxu0 0.0
    %1131 = vmatprep.subr.mxu0 0.0
    %1132 = vmatpush1.xpose.msra.mxu0 0.0
    %1133 = vmatprep.subr.mxu0 0.0
    %1134 = vmatpush1.xpose.msra.mxu0 0.0
    %1135 = vmatprep.subr.mxu0 0.0
    %1136 = vmatpush1.xpose.msra.mxu0 0.0
    %1137 = vmatprep.subr.mxu0 0.0
    %1138 = vmatpush1.xpose.msra.mxu0 0.0
    %1139 = vmatprep.subr.mxu0 0.0
    %1140 = vmatpush1.xpose.msra.mxu0 0.0
    %1141 = vmatprep.subr.mxu0 0.0
    %1142 = vmatpush1.xpose.msra.mxu0 0.0
    %1143 = vmatprep.subr.mxu0 0.0
    %1144 = vmatpush1.xpose.msra.mxu0 0.0
    %1145 = vmatprep.subr.mxu0 0.0
    %1146 = vmatpush1.xpose.msra.mxu0 0.0
    %1147 = vmatprep.subr.mxu0 0.0
    %1148 = vmatpush1.xpose.msra.mxu0 0.0
    %1149 = vmatprep.subr.mxu0 0.0
    %1150 = vmatpush1.xpose.msra.mxu0 0.0
    %1151 = vmatprep.subr.mxu0 0.0
    %1152 = vmatpush1.xpose.msra.mxu0 0.0
    %1153 = vmatprep.subr.mxu0 0.0
    %1154 = vmatpush1.xpose.msra.mxu0 0.0
    %1155 = vmatprep.subr.mxu0 0.0
    %1156 = vmatpush1.xpose.msra.mxu0 0.0
    %1157 = vmatprep.subr.mxu0 0.0
    %1158 = vmatpush1.xpose.msra.mxu0 0.0
    %1159 = vmatprep.subr.mxu0 0.0
    %1160 = vmatpush1.xpose.msra.mxu0 0.0
    %1161 = vmatprep.subr.mxu0 0.0
    %1162 = vmatpush1.xpose.msra.mxu0 0.0
    %1163 = vmatprep.subr.mxu0 0.0
    %1164 = vmatpush1.xpose.msra.mxu0 0.0
    %1165 = vmatprep.subr.mxu0 0.0
    %1166 = vmatpush1.xpose.msra.mxu0 0.0
    %1167 = vmatprep.subr.mxu0 0.0
    %1168 = vmatpush1.xpose.msra.mxu0 0.0
    %1169 = vmatprep.subr.mxu0 0.0
    %1170 = vmatpush1.xpose.msra.mxu0 0.0
    %1171 = vmatprep.subr.mxu0 0.0
    %1172 = vmatpush1.xpose.msra.mxu0 0.0
    %1173 = vmatprep.subr.mxu0 0.0
    %1174 = vmatpush1.xpose.msra.mxu0 0.0
    %1175 = vmatprep.subr.mxu0 0.0
    %1176 = vmatpush1.xpose.msra.mxu0 0.0
    %1177 = vmatprep.subr.mxu0 0.0
    %1178 = vmatpush1.xpose.msra.mxu0 0.0
    %1179 = vmatprep.subr.mxu0 0.0
    %1180 = vmatpush1.xpose.msra.mxu0 0.0
    %1181 = vmatprep.mubr.f32.mxu0 0.0
    %1182 = vmatmul.mubr.f32.gmra.mrb[0].mxu0 %v1113
    %v1183 = vpop.f32.mrb[0].mxu0
    %v1184 = vadd.f32 0.0, %v1183
    %v1185 = vpop.f32.mrb[0].mxu0
    %1186 = vdwg.mxu0
    %v1187 = vsel %vm265, %v1184, -1e+30
    %v1188 = vsel %vm344, %v1187, -inf
    %1189 = vmax.xlane.f32.xlu0 %v1188
    %v1190 = vpop.xlane.xlu0 %1189
    %v1191 = vsub.f32 %v1187, %v1190
    %v1192 = vmul.f32 %v1191, 1.442695
    %v1193 = vpow.pop %v1192
    %v1194 = vsel %vm344, %v1193, 0.0
    %1195 = vadd.xlane.f32.xlu0 %v1194
    %v1196 = vpop.xlane.xlu0 %1195
    %v1197 = vrcp.pop %v1196
    %v1198 = vmul.f32 %v1193, %v1197
    %1200 = vrot.lane.b32.xlu0 %v258, 96
    %v1201 = vpop.permute.xlu0 %1200
    %v1204 = vsel %vm344, %v1198, 0
    %1206 = vmatprep.subr.mxu0 0.0
    %1207 = vmatpush1.msra.mxu0 %v1201
    %1208 = vmatprep.subr.mxu0 0.0
    %1209 = vmatpush1.msra.mxu0 0.0
    %1210 = vmatprep.subr.mxu0 0.0
    %1211 = vmatpush1.msra.mxu0 0.0
    %1212 = vmatprep.subr.mxu0 0.0
    %1213 = vmatpush1.msra.mxu0 0.0
    %1214 = vmatprep.subr.mxu0 0.0
    %1215 = vmatpush1.msra.mxu0 0.0
    %1216 = vmatprep.subr.mxu0 0.0
    %1217 = vmatpush1.msra.mxu0 0.0
    %1218 = vmatprep.subr.mxu0 0.0
    %1219 = vmatpush1.msra.mxu0 0.0
    %1220 = vmatprep.subr.mxu0 0.0
    %1221 = vmatpush1.msra.mxu0 0.0
    %1222 = vmatprep.subr.mxu0 0.0
    %1223 = vmatpush1.msra.mxu0 0.0
    %1224 = vmatprep.subr.mxu0 0.0
    %1225 = vmatpush1.msra.mxu0 0.0
    %1226 = vmatprep.subr.mxu0 0.0
    %1227 = vmatpush1.msra.mxu0 0.0
    %1228 = vmatprep.subr.mxu0 0.0
    %1229 = vmatpush1.msra.mxu0 0.0
    %1230 = vmatprep.subr.mxu0 0.0
    %1231 = vmatpush1.msra.mxu0 0.0
    %1232 = vmatprep.subr.mxu0 0.0
    %1233 = vmatpush1.msra.mxu0 0.0
    %1234 = vmatprep.subr.mxu0 0.0
    %1235 = vmatpush1.msra.mxu0 0.0
    %1236 = vmatprep.subr.mxu0 0.0
    %1237 = vmatpush1.msra.mxu0 0.0
    %1238 = vmatprep.subr.mxu0 0.0
    %1239 = vmatpush1.msra.mxu0 0.0
    %1240 = vmatprep.subr.mxu0 0.0
    %1241 = vmatpush1.msra.mxu0 0.0
    %1242 = vmatprep.subr.mxu0 0.0
    %1243 = vmatpush1.msra.mxu0 0.0
    %1244 = vmatprep.subr.mxu0 0.0
    %1245 = vmatpush1.msra.mxu0 0.0
    %1246 = vmatprep.subr.mxu0 0.0
    %1247 = vmatpush1.msra.mxu0 0.0
    %1248 = vmatprep.subr.mxu0 0.0
    %1249 = vmatpush1.msra.mxu0 0.0
    %1250 = vmatprep.subr.mxu0 0.0
    %1251 = vmatpush1.msra.mxu0 0.0
    %1252 = vmatprep.subr.mxu0 0.0
    %1253 = vmatpush1.msra.mxu0 0.0
    %1254 = vmatprep.subr.mxu0 0.0
    %1255 = vmatpush1.msra.mxu0 0.0
    %1256 = vmatprep.subr.mxu0 0.0
    %1257 = vmatpush1.msra.mxu0 0.0
    %1258 = vmatprep.subr.mxu0 0.0
    %1259 = vmatpush1.msra.mxu0 0.0
    %1260 = vmatprep.subr.mxu0 0.0
    %1261 = vmatpush1.msra.mxu0 0.0
    %1262 = vmatprep.subr.mxu0 0.0
    %1263 = vmatpush1.msra.mxu0 0.0
    %1264 = vmatprep.subr.mxu0 0.0
    %1265 = vmatpush1.msra.mxu0 0.0
    %1266 = vmatprep.subr.mxu0 0.0
    %1267 = vmatpush1.msra.mxu0 0.0
    %1268 = vmatprep.subr.mxu0 0.0
    %1269 = vmatpush1.msra.mxu0 0.0
    %1270 = vmatprep.mubr.f32.mxu0 0.0
    %1271 = vmatmul.mubr.f32.gmra.mrb[0].mxu0 %v1204
    %v1272 = vpop.f32.mrb[0].mxu0
    %v1273 = vadd.f32 0.0, %v1272
    %v1274 = vpop.f32.mrb[0].mxu0
    %1275 = vdwg.mxu0
    %1277 = vrot.lane.b32.xlu0 %v1273, 32
    %v1278 = vpop.permute.xlu0 %1277
    %1280 = vst.msk [vmem:[#allocation2 + $0x8] sm:$0xff] %vm601, %v1278
    %1281 = vrot.lane.b32.xlu0 %v182, 64
    %v1282 = vpop.permute.xlu0 %1281
    %1283 = vrot.lane.b32.xlu0 %v184, 64
    %v1284 = vpop.permute.xlu0 %1283
    %v1285 = vsel %vm266, %v1282, 0
    %v1287 = vsel %vm266, %v1284, 0
    %1289 = vmatprep.subr.mxu0 0.0
    %1290 = vmatpush1.xpose.msra.mxu0 %v1287
    %1291 = vmatprep.subr.mxu0 0.0
    %1292 = vmatpush1.xpose.msra.mxu0 0.0
    %1293 = vmatprep.subr.mxu0 0.0
    %1294 = vmatpush1.xpose.msra.mxu0 0.0
    %1295 = vmatprep.subr.mxu0 0.0
    %1296 = vmatpush1.xpose.msra.mxu0 0.0
    %1297 = vmatprep.subr.mxu0 0.0
    %1298 = vmatpush1.xpose.msra.mxu0 0.0
    %1299 = vmatprep.subr.mxu0 0.0
    %1300 = vmatpush1.xpose.msra.mxu0 0.0
    %1301 = vmatprep.subr.mxu0 0.0
    %1302 = vmatpush1.xpose.msra.mxu0 0.0
    %1303 = vmatprep.subr.mxu0 0.0
    %1304 = vmatpush1.xpose.msra.mxu0 0.0
    %1305 = vmatprep.subr.mxu0 0.0
    %1306 = vmatpush1.xpose.msra.mxu0 0.0
    %1307 = vmatprep.subr.mxu0 0.0
    %1308 = vmatpush1.xpose.msra.mxu0 0.0
    %1309 = vmatprep.subr.mxu0 0.0
    %1310 = vmatpush1.xpose.msra.mxu0 0.0
    %1311 = vmatprep.subr.mxu0 0.0
    %1312 = vmatpush1.xpose.msra.mxu0 0.0
    %1313 = vmatprep.subr.mxu0 0.0
    %1314 = vmatpush1.xpose.msra.mxu0 0.0
    %1315 = vmatprep.subr.mxu0 0.0
    %1316 = vmatpush1.xpose.msra.mxu0 0.0
    %1317 = vmatprep.subr.mxu0 0.0
    %1318 = vmatpush1.xpose.msra.mxu0 0.0
    %1319 = vmatprep.subr.mxu0 0.0
    %1320 = vmatpush1.xpose.msra.mxu0 0.0
    %1321 = vmatprep.subr.mxu0 0.0
    %1322 = vmatpush1.xpose.msra.mxu0 0.0
    %1323 = vmatprep.subr.mxu0 0.0
    %1324 = vmatpush1.xpose.msra.mxu0 0.0
    %1325 = vmatprep.subr.mxu0 0.0
    %1326 = vmatpush1.xpose.msra.mxu0 0.0
    %1327 = vmatprep.subr.mxu0 0.0
    %1328 = vmatpush1.xpose.msra.mxu0 0.0
    %1329 = vmatprep.subr.mxu0 0.0
    %1330 = vmatpush1.xpose.msra.mxu0 0.0
    %1331 = vmatprep.subr.mxu0 0.0
    %1332 = vmatpush1.xpose.msra.mxu0 0.0
    %1333 = vmatprep.subr.mxu0 0.0
    %1334 = vmatpush1.xpose.msra.mxu0 0.0
    %1335 = vmatprep.subr.mxu0 0.0
    %1336 = vmatpush1.xpose.msra.mxu0 0.0
    %1337 = vmatprep.subr.mxu0 0.0
    %1338 = vmatpush1.xpose.msra.mxu0 0.0
    %1339 = vmatprep.subr.mxu0 0.0
    %1340 = vmatpush1.xpose.msra.mxu0 0.0
    %1341 = vmatprep.subr.mxu0 0.0
    %1342 = vmatpush1.xpose.msra.mxu0 0.0
    %1343 = vmatprep.subr.mxu0 0.0
    %1344 = vmatpush1.xpose.msra.mxu0 0.0
    %1345 = vmatprep.subr.mxu0 0.0
    %1346 = vmatpush1.xpose.msra.mxu0 0.0
    %1347 = vmatprep.subr.mxu0 0.0
    %1348 = vmatpush1.xpose.msra.mxu0 0.0
    %1349 = vmatprep.subr.mxu0 0.0
    %1350 = vmatpush1.xpose.msra.mxu0 0.0
    %1351 = vmatprep.subr.mxu0 0.0
    %1352 = vmatpush1.xpose.msra.mxu0 0.0
    %1353 = vmatprep.mubr.f32.mxu0 0.0
    %1354 = vmatmul.mubr.f32.gmra.mrb[0].mxu0 %v1285
    %v1355 = vpop.f32.mrb[0].mxu0
    %v1356 = vadd.f32 0.0, %v1355
    %v1357 = vpop.f32.mrb[0].mxu0
    %1358 = vdwg.mxu0
    %v1359 = vsel %vm265, %v1356, -1e+30
    %v1360 = vsel %vm344, %v1359, -inf
    %1361 = vmax.xlane.f32.xlu0 %v1360
    %v1362 = vpop.xlane.xlu0 %1361
    %v1363 = vsub.f32 %v1359, %v1362
    %v1364 = vmul.f32 %v1363, 1.442695
    %v1365 = vpow.pop %v1364
    %v1366 = vsel %vm344, %v1365, 0.0
    %1367 = vadd.xlane.f32.xlu0 %v1366
    %v1368 = vpop.xlane.xlu0 %1367
    %v1369 = vrcp.pop %v1368
    %v1370 = vmul.f32 %v1365, %v1369
    %1371 = vrot.lane.b32.xlu0 %v258, 64
    %v1372 = vpop.permute.xlu0 %1371
    %v1375 = vsel %vm344, %v1370, 0
    %1377 = vmatprep.subr.mxu0 0.0
    %1378 = vmatpush1.msra.mxu0 %v1372
    %1379 = vmatprep.subr.mxu0 0.0
    %1380 = vmatpush1.msra.mxu0 0.0
    %1381 = vmatprep.subr.mxu0 0.0
    %1382 = vmatpush1.msra.mxu0 0.0
    %1383 = vmatprep.subr.mxu0 0.0
    %1384 = vmatpush1.msra.mxu0 0.0
    %1385 = vmatprep.subr.mxu0 0.0
    %1386 = vmatpush1.msra.mxu0 0.0
    %1387 = vmatprep.subr.mxu0 0.0
    %1388 = vmatpush1.msra.mxu0 0.0
    %1389 = vmatprep.subr.mxu0 0.0
    %1390 = vmatpush1.msra.mxu0 0.0
    %1391 = vmatprep.subr.mxu0 0.0
    %1392 = vmatpush1.msra.mxu0 0.0
    %1393 = vmatprep.subr.mxu0 0.0
    %1394 = vmatpush1.msra.mxu0 0.0
    %1395 = vmatprep.subr.mxu0 0.0
    %1396 = vmatpush1.msra.mxu0 0.0
    %1397 = vmatprep.subr.mxu0 0.0
    %1398 = vmatpush1.msra.mxu0 0.0
    %1399 = vmatprep.subr.mxu0 0.0
    %1400 = vmatpush1.msra.mxu0 0.0
    %1401 = vmatprep.subr.mxu0 0.0
    %1402 = vmatpush1.msra.mxu0 0.0
    %1403 = vmatprep.subr.mxu0 0.0
    %1404 = vmatpush1.msra.mxu0 0.0
    %1405 = vmatprep.subr.mxu0 0.0
    %1406 = vmatpush1.msra.mxu0 0.0
    %1407 = vmatprep.subr.mxu0 0.0
    %1408 = vmatpush1.msra.mxu0 0.0
    %1409 = vmatprep.subr.mxu0 0.0
    %1410 = vmatpush1.msra.mxu0 0.0
    %1411 = vmatprep.subr.mxu0 0.0
    %1412 = vmatpush1.msra.mxu0 0.0
    %1413 = vmatprep.subr.mxu0 0.0
    %1414 = vmatpush1.msra.mxu0 0.0
    %1415 = vmatprep.subr.mxu0 0.0
    %1416 = vmatpush1.msra.mxu0 0.0
    %1417 = vmatprep.subr.mxu0 0.0
    %1418 = vmatpush1.msra.mxu0 0.0
    %1419 = vmatprep.subr.mxu0 0.0
    %1420 = vmatpush1.msra.mxu0 0.0
    %1421 = vmatprep.subr.mxu0 0.0
    %1422 = vmatpush1.msra.mxu0 0.0
    %1423 = vmatprep.subr.mxu0 0.0
    %1424 = vmatpush1.msra.mxu0 0.0
    %1425 = vmatprep.subr.mxu0 0.0
    %1426 = vmatpush1.msra.mxu0 0.0
    %1427 = vmatprep.subr.mxu0 0.0
    %1428 = vmatpush1.msra.mxu0 0.0
    %1429 = vmatprep.subr.mxu0 0.0
    %1430 = vmatpush1.msra.mxu0 0.0
    %1431 = vmatprep.subr.mxu0 0.0
    %1432 = vmatpush1.msra.mxu0 0.0
    %1433 = vmatprep.subr.mxu0 0.0
    %1434 = vmatpush1.msra.mxu0 0.0
    %1435 = vmatprep.subr.mxu0 0.0
    %1436 = vmatpush1.msra.mxu0 0.0
    %1437 = vmatprep.subr.mxu0 0.0
    %1438 = vmatpush1.msra.mxu0 0.0
    %1439 = vmatprep.subr.mxu0 0.0
    %1440 = vmatpush1.msra.mxu0 0.0
    %1441 = vmatprep.mubr.f32.mxu0 0.0
    %1442 = vmatmul.mubr.f32.gmra.mrb[0].mxu0 %v1375
    %v1443 = vpop.f32.mrb[0].mxu0
    %v1444 = vadd.f32 0.0, %v1443
    %v1445 = vpop.f32.mrb[0].mxu0
    %1446 = vdwg.mxu0
    %1448 = vrot.lane.b32.xlu0 %v1444, 64
    %v1449 = vpop.permute.xlu0 %1448
    %1451 = vst.msk [vmem:[#allocation2 + $0x8] sm:$0xff] %vm773, %v1449
    %1452 = vrot.lane.b32.xlu0 %v182, 32
    %v1453 = vpop.permute.xlu0 %1452
    %1454 = vrot.lane.b32.xlu0 %v184, 32
    %v1455 = vpop.permute.xlu0 %1454
    %v1456 = vsel %vm266, %v1453, 0
    %v1458 = vsel %vm266, %v1455, 0
    %1460 = vmatprep.subr.mxu0 0.0
    %1461 = vmatpush1.xpose.msra.mxu0 %v1458
    %1462 = vmatprep.subr.mxu0 0.0
    %1463 = vmatpush1.xpose.msra.mxu0 0.0
    %1464 = vmatprep.subr.mxu0 0.0
    %1465 = vmatpush1.xpose.msra.mxu0 0.0
    %1466 = vmatprep.subr.mxu0 0.0
    %1467 = vmatpush1.xpose.msra.mxu0 0.0
    %1468 = vmatprep.subr.mxu0 0.0
    %1469 = vmatpush1.xpose.msra.mxu0 0.0
    %1470 = vmatprep.subr.mxu0 0.0
    %1471 = vmatpush1.xpose.msra.mxu0 0.0
    %1472 = vmatprep.subr.mxu0 0.0
    %1473 = vmatpush1.xpose.msra.mxu0 0.0
    %1474 = vmatprep.subr.mxu0 0.0
    %1475 = vmatpush1.xpose.msra.mxu0 0.0
    %1476 = vmatprep.subr.mxu0 0.0
    %1477 = vmatpush1.xpose.msra.mxu0 0.0
    %1478 = vmatprep.subr.mxu0 0.0
    %1479 = vmatpush1.xpose.msra.mxu0 0.0
    %1480 = vmatprep.subr.mxu0 0.0
    %1481 = vmatpush1.xpose.msra.mxu0 0.0
    %1482 = vmatprep.subr.mxu0 0.0
    %1483 = vmatpush1.xpose.msra.mxu0 0.0
    %1484 = vmatprep.subr.mxu0 0.0
    %1485 = vmatpush1.xpose.msra.mxu0 0.0
    %1486 = vmatprep.subr.mxu0 0.0
    %1487 = vmatpush1.xpose.msra.mxu0 0.0
    %1488 = vmatprep.subr.mxu0 0.0
    %1489 = vmatpush1.xpose.msra.mxu0 0.0
    %1490 = vmatprep.subr.mxu0 0.0
    %1491 = vmatpush1.xpose.msra.mxu0 0.0
    %1492 = vmatprep.subr.mxu0 0.0
    %1493 = vmatpush1.xpose.msra.mxu0 0.0
    %1494 = vmatprep.subr.mxu0 0.0
    %1495 = vmatpush1.xpose.msra.mxu0 0.0
    %1496 = vmatprep.subr.mxu0 0.0
    %1497 = vmatpush1.xpose.msra.mxu0 0.0
    %1498 = vmatprep.subr.mxu0 0.0
    %1499 = vmatpush1.xpose.msra.mxu0 0.0
    %1500 = vmatprep.subr.mxu0 0.0
    %1501 = vmatpush1.xpose.msra.mxu0 0.0
    %1502 = vmatprep.subr.mxu0 0.0
    %1503 = vmatpush1.xpose.msra.mxu0 0.0
    %1504 = vmatprep.subr.mxu0 0.0
    %1505 = vmatpush1.xpose.msra.mxu0 0.0
    %1506 = vmatprep.subr.mxu0 0.0
    %1507 = vmatpush1.xpose.msra.mxu0 0.0
    %1508 = vmatprep.subr.mxu0 0.0
    %1509 = vmatpush1.xpose.msra.mxu0 0.0
    %1510 = vmatprep.subr.mxu0 0.0
    %1511 = vmatpush1.xpose.msra.mxu0 0.0
    %1512 = vmatprep.subr.mxu0 0.0
    %1513 = vmatpush1.xpose.msra.mxu0 0.0
    %1514 = vmatprep.subr.mxu0 0.0
    %1515 = vmatpush1.xpose.msra.mxu0 0.0
    %1516 = vmatprep.subr.mxu0 0.0
    %1517 = vmatpush1.xpose.msra.mxu0 0.0
    %1518 = vmatprep.subr.mxu0 0.0
    %1519 = vmatpush1.xpose.msra.mxu0 0.0
    %1520 = vmatprep.subr.mxu0 0.0
    %1521 = vmatpush1.xpose.msra.mxu0 0.0
    %1522 = vmatprep.subr.mxu0 0.0
    %1523 = vmatpush1.xpose.msra.mxu0 0.0
    %1524 = vmatprep.mubr.f32.mxu0 0.0
    %1525 = vmatmul.mubr.f32.gmra.mrb[0].mxu0 %v1456
    %v1526 = vpop.f32.mrb[0].mxu0
    %v1527 = vadd.f32 0.0, %v1526
    %v1528 = vpop.f32.mrb[0].mxu0
    %1529 = vdwg.mxu0
    %v1530 = vsel %vm265, %v1527, -1e+30
    %v1531 = vsel %vm344, %v1530, -inf
    %1532 = vmax.xlane.f32.xlu0 %v1531
    %v1533 = vpop.xlane.xlu0 %1532
    %v1534 = vsub.f32 %v1530, %v1533
    %v1535 = vmul.f32 %v1534, 1.442695
    %v1536 = vpow.pop %v1535
    %v1537 = vsel %vm344, %v1536, 0.0
    %1538 = vadd.xlane.f32.xlu0 %v1537
    %v1539 = vpop.xlane.xlu0 %1538
    %v1540 = vrcp.pop %v1539
    %v1541 = vmul.f32 %v1536, %v1540
    %1542 = vrot.lane.b32.xlu0 %v258, 32
    %v1543 = vpop.permute.xlu0 %1542
    %v1546 = vsel %vm344, %v1541, 0
    %1548 = vmatprep.subr.mxu0 0.0
    %1549 = vmatpush1.msra.mxu0 %v1543
    %1550 = vmatprep.subr.mxu0 0.0
    %1551 = vmatpush1.msra.mxu0 0.0
    %1552 = vmatprep.subr.mxu0 0.0
    %1553 = vmatpush1.msra.mxu0 0.0
    %1554 = vmatprep.subr.mxu0 0.0
    %1555 = vmatpush1.msra.mxu0 0.0
    %1556 = vmatprep.subr.mxu0 0.0
    %1557 = vmatpush1.msra.mxu0 0.0
    %1558 = vmatprep.subr.mxu0 0.0
    %1559 = vmatpush1.msra.mxu0 0.0
    %1560 = vmatprep.subr.mxu0 0.0
    %1561 = vmatpush1.msra.mxu0 0.0
    %1562 = vmatprep.subr.mxu0 0.0
    %1563 = vmatpush1.msra.mxu0 0.0
    %1564 = vmatprep.subr.mxu0 0.0
    %1565 = vmatpush1.msra.mxu0 0.0
    %1566 = vmatprep.subr.mxu0 0.0
    %1567 = vmatpush1.msra.mxu0 0.0
    %1568 = vmatprep.subr.mxu0 0.0
    %1569 = vmatpush1.msra.mxu0 0.0
    %1570 = vmatprep.subr.mxu0 0.0
    %1571 = vmatpush1.msra.mxu0 0.0
    %1572 = vmatprep.subr.mxu0 0.0
    %1573 = vmatpush1.msra.mxu0 0.0
    %1574 = vmatprep.subr.mxu0 0.0
    %1575 = vmatpush1.msra.mxu0 0.0
    %1576 = vmatprep.subr.mxu0 0.0
    %1577 = vmatpush1.msra.mxu0 0.0
    %1578 = vmatprep.subr.mxu0 0.0
    %1579 = vmatpush1.msra.mxu0 0.0
    %1580 = vmatprep.subr.mxu0 0.0
    %1581 = vmatpush1.msra.mxu0 0.0
    %1582 = vmatprep.subr.mxu0 0.0
    %1583 = vmatpush1.msra.mxu0 0.0
    %1584 = vmatprep.subr.mxu0 0.0
    %1585 = vmatpush1.msra.mxu0 0.0
    %1586 = vmatprep.subr.mxu0 0.0
    %1587 = vmatpush1.msra.mxu0 0.0
    %1588 = vmatprep.subr.mxu0 0.0
    %1589 = vmatpush1.msra.mxu0 0.0
    %1590 = vmatprep.subr.mxu0 0.0
    %1591 = vmatpush1.msra.mxu0 0.0
    %1592 = vmatprep.subr.mxu0 0.0
    %1593 = vmatpush1.msra.mxu0 0.0
    %1594 = vmatprep.subr.mxu0 0.0
    %1595 = vmatpush1.msra.mxu0 0.0
    %1596 = vmatprep.subr.mxu0 0.0
    %1597 = vmatpush1.msra.mxu0 0.0
    %1598 = vmatprep.subr.mxu0 0.0
    %1599 = vmatpush1.msra.mxu0 0.0
    %1600 = vmatprep.subr.mxu0 0.0
    %1601 = vmatpush1.msra.mxu0 0.0
    %1602 = vmatprep.subr.mxu0 0.0
    %1603 = vmatpush1.msra.mxu0 0.0
    %1604 = vmatprep.subr.mxu0 0.0
    %1605 = vmatpush1.msra.mxu0 0.0
    %1606 = vmatprep.subr.mxu0 0.0
    %1607 = vmatpush1.msra.mxu0 0.0
    %1608 = vmatprep.subr.mxu0 0.0
    %1609 = vmatpush1.msra.mxu0 0.0
    %1610 = vmatprep.subr.mxu0 0.0
    %1611 = vmatpush1.msra.mxu0 0.0
    %1612 = vmatprep.mubr.f32.mxu0 0.0
    %1613 = vmatmul.mubr.f32.gmra.mrb[0].mxu0 %v1546
    %v1614 = vpop.f32.mrb[0].mxu0
    %v1615 = vadd.f32 0.0, %v1614
    %v1616 = vpop.f32.mrb[0].mxu0
    %1617 = vdwg.mxu0
    %1619 = vrot.lane.b32.xlu0 %v1615, 96
    %v1620 = vpop.permute.xlu0 %1619
    %1622 = vst.msk [vmem:[#allocation2 + $0x8] sm:$0xff] %vm945, %v1620
    %v1623 = vld [vmem:[#allocation2] sm:$0xff]
    %v1624 = vld [vmem:[#allocation2 + $0x8] sm:$0xff]
    %v1625 = vld [vmem:[#allocation8] sm:$0xff]
    %v1626 = vld [vmem:[#allocation8 + $0x8] sm:$0xff]
    %v1627 = vld [vmem:[#allocation8 + $0x10] sm:$0xff]
    %v1628 = vld [vmem:[#allocation8 + $0x18] sm:$0xff]
    %v1629 = vld [vmem:[#allocation8 + $0x20] sm:$0xff]
    %v1630 = vld [vmem:[#allocation8 + $0x28] sm:$0xff]
    %v1631 = vld [vmem:[#allocation8 + $0x30] sm:$0xff]
    %v1632 = vld [vmem:[#allocation8 + $0x38] sm:$0xff]
    %v1633 = vld [vmem:[#allocation8 + $0x40] sm:$0xff]
    %v1634 = vld [vmem:[#allocation8 + $0x48] sm:$0xff]
    %v1635 = vld [vmem:[#allocation8 + $0x50] sm:$0xff]
    %v1636 = vld [vmem:[#allocation8 + $0x58] sm:$0xff]
    %v1637 = vld [vmem:[#allocation8 + $0x60] sm:$0xff]
    %v1638 = vld [vmem:[#allocation8 + $0x68] sm:$0xff]
    %v1639 = vld [vmem:[#allocation8 + $0x70] sm:$0xff]
    %v1640 = vld [vmem:[#allocation8 + $0x78] sm:$0xff]
    %v1641 = vld [vmem:[%s3] sm:$0x1]
    %v1643 = vlaneseq
    %v1644 = vshrl.u32 %v1643, 7
    %v1645 = vsub.s32 0, %v1644
    %v1646 = vrot.slane %v1641, %v1645
    %1648 = vmatprep.subr.mxu0 0.0
    %1649 = vmatpush1.msra.mxu0 %v1625
    %1650 = vmatprep.subr.mxu0 0.0
    %1651 = vmatpush1.msra.mxu0 %v1626
    %1652 = vmatprep.subr.mxu0 0.0
    %1653 = vmatpush1.msra.mxu0 %v1627
    %1654 = vmatprep.subr.mxu0 0.0
    %1655 = vmatpush1.msra.mxu0 %v1628
    %1656 = vmatprep.subr.mxu0 0.0
    %1657 = vmatpush1.msra.mxu0 %v1629
    %1658 = vmatprep.subr.mxu0 0.0
    %1659 = vmatpush1.msra.mxu0 %v1630
    %1660 = vmatprep.subr.mxu0 0.0
    %1661 = vmatpush1.msra.mxu0 %v1631
    %1662 = vmatprep.subr.mxu0 0.0
    %1663 = vmatpush1.msra.mxu0 %v1632
    %1664 = vmatprep.subr.mxu0 0.0
    %1665 = vmatpush1.msra.mxu0 %v1633
    %1666 = vmatprep.subr.mxu0 0.0
    %1667 = vmatpush1.msra.mxu0 %v1634
    %1668 = vmatprep.subr.mxu0 0.0
    %1669 = vmatpush1.msra.mxu0 %v1635
    %1670 = vmatprep.subr.mxu0 0.0
    %1671 = vmatpush1.msra.mxu0 %v1636
    %1672 = vmatprep.subr.mxu0 0.0
    %1673 = vmatpush1.msra.mxu0 %v1637
    %1674 = vmatprep.subr.mxu0 0.0
    %1675 = vmatpush1.msra.mxu0 %v1638
    %1676 = vmatprep.subr.mxu0 0.0
    %1677 = vmatpush1.msra.mxu0 %v1639
    %1678 = vmatprep.subr.mxu0 0.0
    %1679 = vmatpush1.msra.mxu0 %v1640
    %1680 = vmatprep.subr.mxu0 0.0
    %1681 = vmatpush1.msra.mxu0 0.0
    %1682 = vmatprep.subr.mxu0 0.0
    %1683 = vmatpush1.msra.mxu0 0.0
    %1684 = vmatprep.subr.mxu0 0.0
    %1685 = vmatpush1.msra.mxu0 0.0
    %1686 = vmatprep.subr.mxu0 0.0
    %1687 = vmatpush1.msra.mxu0 0.0
    %1688 = vmatprep.subr.mxu0 0.0
    %1689 = vmatpush1.msra.mxu0 0.0
    %1690 = vmatprep.subr.mxu0 0.0
    %1691 = vmatpush1.msra.mxu0 0.0
    %1692 = vmatprep.subr.mxu0 0.0
    %1693 = vmatpush1.msra.mxu0 0.0
    %1694 = vmatprep.subr.mxu0 0.0
    %1695 = vmatpush1.msra.mxu0 0.0
    %1696 = vmatprep.subr.mxu0 0.0
    %1697 = vmatpush1.msra.mxu0 0.0
    %1698 = vmatprep.subr.mxu0 0.0
    %1699 = vmatpush1.msra.mxu0 0.0
    %1700 = vmatprep.subr.mxu0 0.0
    %1701 = vmatpush1.msra.mxu0 0.0
    %1702 = vmatprep.subr.mxu0 0.0
    %1703 = vmatpush1.msra.mxu0 0.0
    %1704 = vmatprep.subr.mxu0 0.0
    %1705 = vmatpush1.msra.mxu0 0.0
    %1706 = vmatprep.subr.mxu0 0.0
    %1707 = vmatpush1.msra.mxu0 0.0
    %1708 = vmatprep.subr.mxu0 0.0
    %1709 = vmatpush1.msra.mxu0 0.0
    %1710 = vmatprep.subr.mxu0 0.0
    %1711 = vmatpush1.msra.mxu0 0.0
    %1712 = vmatprep.mubr.f32.mxu0 0.0
    %1713 = vmatmul.mubr.f32.gmra.mrb[0].mxu0 %v1623
    %v1714 = vpop.f32.mrb[0].mxu0
    %v1715 = vadd.f32 %v1646, %v1714
    %v1716 = vpop.f32.mrb[0].mxu0
    %1717 = vmatprep.mubr.f32.mxu0 0.0
    %1718 = vmatmul.mubr.f32.gmra.mrb[0].mxu0 %v1624
    %v1719 = vpop.f32.mrb[0].mxu0
    %v1720 = vadd.f32 %v1646, %v1719
    %v1721 = vpop.f32.mrb[0].mxu0
    %1722 = vdwg.mxu0
    %1723 = vst [vmem:[#allocation9] sm:$0xff] %v1715
    %1724 = vst [vmem:[#allocation9 + $0x8] sm:$0xff] %v1720
    // Predicated region
    $region30: #{tpu_custom_call.1} parent=1 // pred_check
      _
    $region31: #{tpu_custom_call.1} parent=1 // pred_check_branch
      %1726 = sbr.rel (0) target = $region33
    $region32: #{tpu_custom_call.1} parent=1 // pred_region
      %s1728 = ssub.s32 256, 256
      %1729 = vsyncadd [#allocation5], %s1728
      %s1730 = sshll.u32 [#allocation9], 4
      %s1731 = int_to_ptr.vmem [resolvable:$true] %s1730
      %1736 = dma.vmem_to_hbm [thread:$0]  %s1731, 256, %s4, [#allocation5], 128, 128, 8
    $region33: #{tpu_custom_call.1} parent=1 // pred_fallthru
      _
    // Predicated region
    $region34: #{tpu_custom_call.1} parent=1 // pred_check
      _
    $region35: #{tpu_custom_call.1} parent=1 // pred_check_branch
      %1738 = sbr.rel (0) target = $region37
    $region36: #{tpu_custom_call.1} parent=1 // pred_region
      %1739 = dma.done [#allocation5], 256
    $region37: #{tpu_custom_call.1} parent=1 // pred_fallthru
      _
    %1740 = vsyncpa [#allocation4], 1
    %1741 = vsyncpa [#allocation7], 1
    %1742 = vsyncpa [#allocation5], 1

</llo_original>
